<compile_context>
chip_gen: v7x
topology: tpu7x:2x2x1
jax: 0.10.0
libtpu: 0.0.40
codegen_flags: <defaults>
</compile_context>

<pallas_src>
import functools

import jax
import jax.numpy as jnp
from jax import lax
from jax.experimental import pallas as pl
from jax.experimental.pallas import tpu as pltpu


def _round_up(v, m):
    return ((v + m - 1) // m) * m


def _lstm_kernel(x_ref, h0_ref, c0_ref, w_ref, b_ref, w_fc_ref, b_fc_ref,
                 y_ref, h_out_ref, c_out_ref, *, seq_len, hidden_pad):
    Hp = hidden_pad
    w = w_ref[...]          # (Ip + Hp, 4*Hp)  fused [w_ih^T ; w_hh^T], gate-padded
    b = b_ref[...]          # (1, 4*Hp)        pre-summed b_ih + b_hh, gate-padded
    w_fc = w_fc_ref[...]    # (Hp, Ip)
    b_fc = b_fc_ref[...]    # (1, Ip)

    def step(t, carry):
        h_prev, c_prev = carry
        x_t = x_ref[t]                                    # (Np, Ip)
        xh = jnp.concatenate([x_t, h_prev], axis=-1)      # (Np, Ip + Hp)
        gates = jnp.dot(xh, w, preferred_element_type=jnp.float32) + b
        # PyTorch LSTMCell gate order [i, f, g, o]; each slice is lane-aligned
        # because Hp is a multiple of 128.
        i_g = jax.nn.sigmoid(gates[:, 0 * Hp:1 * Hp])
        f_g = jax.nn.sigmoid(gates[:, 1 * Hp:2 * Hp])
        g_g = jnp.tanh(gates[:, 2 * Hp:3 * Hp])
        o_g = jax.nn.sigmoid(gates[:, 3 * Hp:4 * Hp])
        c_new = f_g * c_prev + i_g * g_g
        h_new = o_g * jnp.tanh(c_new)
        return h_new, c_new

    h_fin, c_fin = lax.fori_loop(0, seq_len, step,
                                 (h0_ref[...], c0_ref[...]), unroll=True)

    h_out_ref[...] = h_fin.astype(h_out_ref.dtype)
    c_out_ref[...] = c_fin.astype(c_out_ref.dtype)
    y = jnp.dot(h_fin, w_fc, preferred_element_type=jnp.float32) + b_fc
    y_ref[...] = y.astype(y_ref.dtype)


@jax.jit
def lstm_forward(x, h0, c0, params):
    """x: (L, N, I) f32; h0/c0: (N, H) f32. Returns (y, h, c) like the torch module."""
    L, N, I = x.shape
    H = h0.shape[-1]

    Np = _round_up(max(N, 8), 8)    # sublane height
    Ip = _round_up(I, 128)          # lane width for x / y
    Hp = _round_up(H, 128)          # lane width per gate and for h / c

    f32 = jnp.float32

    # ---- fused, gate-padded recurrent weight: (Ip + Hp, 4*Hp) ---------------
    # Columns are grouped per gate, each gate zero-padded H -> Hp (lane aligned).
    w_ih_g = jnp.pad(params["w_ih"].T.reshape(I, 4, H),
                     ((0, 0), (0, 0), (0, Hp - H)))                 # (I, 4, Hp)
    w_hh_g = jnp.pad(params["w_hh"].T.reshape(H, 4, H),
                     ((0, 0), (0, 0), (0, Hp - H)))                 # (H, 4, Hp)
    w_ih_p = jnp.pad(w_ih_g.reshape(I, 4 * Hp), ((0, Ip - I), (0, 0)))
    w_hh_p = jnp.pad(w_hh_g.reshape(H, 4 * Hp), ((0, Hp - H), (0, 0)))
    w_fused = jnp.concatenate([w_ih_p, w_hh_p], axis=0).astype(f32)

    # Pre-summed bias, gate-padded: (1, 4*Hp)
    b_fused = jnp.pad((params["b_ih"] + params["b_hh"]).reshape(4, H),
                      ((0, 0), (0, Hp - H))).reshape(1, 4 * Hp).astype(f32)

    # FC head: (Hp, Ip), (1, Ip)
    w_fc_p = jnp.pad(params["w_fc"].T, ((0, Hp - H), (0, Ip - I))).astype(f32)
    b_fc_p = jnp.pad(params["b_fc"], (0, Ip - I)).reshape(1, Ip).astype(f32)

    # Padded activations
    x_p = jnp.pad(x, ((0, 0), (0, Np - N), (0, Ip - I))).astype(f32)
    h0_p = jnp.pad(h0, ((0, Np - N), (0, Hp - H))).astype(f32)
    c0_p = jnp.pad(c0, ((0, Np - N), (0, Hp - H))).astype(f32)

    kernel = functools.partial(_lstm_kernel, seq_len=L, hidden_pad=Hp)
    vmem = pl.BlockSpec(memory_space=pltpu.MemorySpace.VMEM)

    y_p, h_p, c_p = pl.pallas_call(
        kernel,
        in_specs=[vmem] * 7,
        out_specs=(vmem, vmem, vmem),
        out_shape=(
            jax.ShapeDtypeStruct((Np, Ip), x.dtype),
            jax.ShapeDtypeStruct((Np, Hp), x.dtype),
            jax.ShapeDtypeStruct((Np, Hp), x.dtype),
        ),
    )(x_p, h0_p, c0_p, w_fused, b_fused, w_fc_p, b_fc_p)

    return y_p[:N, :I], h_p[:N, :H], c_p[:N, :H]


def lstm_reference(x, h0, c0, params):
    """Pure-JAX reference matching torch.nn.LSTMCell + Linear semantics."""
    H = h0.shape[-1]
    h, c = h0, c0
    for t in range(x.shape[0]):
        gates = (x[t] @ params["w_ih"].T + params["b_ih"]
                 + h @ params["w_hh"].T + params["b_hh"])
        i_g = jax.nn.sigmoid(gates[:, 0 * H:1 * H])
        f_g = jax.nn.sigmoid(gates[:, 1 * H:2 * H])
        g_g = jnp.tanh(gates[:, 2 * H:3 * H])
        o_g = jax.nn.sigmoid(gates[:, 3 * H:4 * H])
        c = f_g * c + i_g * g_g
        h = o_g * jnp.tanh(c)
    y = h @ params["w_fc"].T + params["b_fc"]
    return y, h, c


def init_params(key, input_size, hidden_size):
    # Deterministic init mimicking PyTorch's uniform(-1/sqrt(H), 1/sqrt(H)).
    ks = jax.random.split(key, 6)
    bound = 1.0 / jnp.sqrt(jnp.float32(hidden_size))
    u = lambda k, shape: jax.random.uniform(k, shape, jnp.float32, -bound, bound)
    return {
        "w_ih": u(ks[0], (4 * hidden_size, input_size)),
        "w_hh": u(ks[1], (4 * hidden_size, hidden_size)),
        "b_ih": u(ks[2], (4 * hidden_size,)),
        "b_hh": u(ks[3], (4 * hidden_size,)),
        "w_fc": u(ks[4], (input_size, hidden_size)),
        "b_fc": u(ks[5], (input_size,)),
    }


if __name__ == "__main__":
    L, N, INPUT_SIZE, HIDDEN_SIZE = 8, 4, 16, 32

    key = jax.random.PRNGKey(0)
    k_x, k_p = jax.random.split(key)
    x = jax.random.normal(k_x, (L, N, INPUT_SIZE), jnp.float32)
    h0 = jnp.zeros((N, HIDDEN_SIZE), jnp.float32)   # h defaults to zeros (as in forward)
    c0 = jnp.zeros((N, HIDDEN_SIZE), jnp.float32)   # c defaults to zeros (as in forward)
    params = init_params(k_p, INPUT_SIZE, HIDDEN_SIZE)

    y, h, c = lstm_forward(x, h0, c0, params)
    jax.block_until_ready((y, h, c))

    y_ref, h_ref, c_ref = lstm_reference(x, h0, c0, params)
    assert jnp.allclose(y, y_ref, atol=1e-5, rtol=1e-5)
    assert jnp.allclose(h, h_ref, atol=1e-5, rtol=1e-5)
    assert jnp.allclose(c, c_ref, atol=1e-5, rtol=1e-5)

    print("KERNEL_OK")
</pallas_src>

<mosaic_0001>
module attributes {stable_mosaic.version = 11 : i64} {
  func.func @_lstm_kernel(%arg0: memref<8x8x128xf32, #tpu.memory_space<vmem>>, %arg1: memref<8x128xf32, #tpu.memory_space<vmem>>, %arg2: memref<8x128xf32, #tpu.memory_space<vmem>>, %arg3: memref<256x512xf32, #tpu.memory_space<vmem>>, %arg4: memref<1x512xf32, #tpu.memory_space<vmem>>, %arg5: memref<128x128xf32, #tpu.memory_space<vmem>>, %arg6: memref<1x128xf32, #tpu.memory_space<vmem>>, %arg7: memref<8x128xf32, #tpu.memory_space<vmem>>, %arg8: memref<8x128xf32, #tpu.memory_space<vmem>>, %arg9: memref<8x128xf32, #tpu.memory_space<vmem>>) attributes {dimension_semantics = [], scalar_prefetch = 0 : i64, scratch_operands = 0 : i64, tpu.core_type = #tpu.core_type<tc>} {
    %c0 = arith.constant 0 : index
    %c0_0 = arith.constant 0 : index
    %0 = vector.load %arg3[%c0, %c0_0] : memref<256x512xf32, #tpu.memory_space<vmem>>, vector<256x512xf32>
    %c0_1 = arith.constant 0 : index
    %c0_2 = arith.constant 0 : index
    %1 = vector.load %arg4[%c0_1, %c0_2] : memref<1x512xf32, #tpu.memory_space<vmem>>, vector<1x512xf32>
    %c0_3 = arith.constant 0 : index
    %c0_4 = arith.constant 0 : index
    %2 = vector.load %arg5[%c0_3, %c0_4] : memref<128x128xf32, #tpu.memory_space<vmem>>, vector<128x128xf32>
    %c0_5 = arith.constant 0 : index
    %c0_6 = arith.constant 0 : index
    %3 = vector.load %arg6[%c0_5, %c0_6] : memref<1x128xf32, #tpu.memory_space<vmem>>, vector<1x128xf32>
    %c0_7 = arith.constant 0 : index
    %c0_8 = arith.constant 0 : index
    %4 = vector.load %arg1[%c0_7, %c0_8] : memref<8x128xf32, #tpu.memory_space<vmem>>, vector<8x128xf32>
    %c0_9 = arith.constant 0 : index
    %c0_10 = arith.constant 0 : index
    %5 = vector.load %arg2[%c0_9, %c0_10] : memref<8x128xf32, #tpu.memory_space<vmem>>, vector<8x128xf32>
    %c0_i32 = arith.constant 0 : i32
    %6 = arith.index_cast %c0_i32 : i32 to index
    %c0_11 = arith.constant 0 : index
    %c0_12 = arith.constant 0 : index
    %7 = vector.load %arg0[%6, %c0_11, %c0_12] : memref<8x8x128xf32, #tpu.memory_space<vmem>>, vector<1x8x128xf32>
    %8 = vector.shape_cast %7 : vector<1x8x128xf32> to vector<8x128xf32>
    %9 = tpu.concatenate %8, %4 in 1 : vector<8x128xf32>, vector<8x128xf32> -> vector<8x256xf32>
    %cst = arith.constant dense<0.000000e+00> : vector<8x512xf32>
    %10 = tpu.matmul %9, %0, %cst {dimension_numbers = #tpu.dot_dimension_numbers<[1], [0], [0], [1], [0, 0, 1, 1], [], []>} : vector<8x256xf32>, vector<256x512xf32>, vector<8x512xf32> -> vector<8x512xf32>
    %11 = vector.broadcast %1 : vector<1x512xf32> to vector<8x512xf32>
    %12 = arith.addf %10, %11 : vector<8x512xf32>
    %13 = vector.extract_strided_slice %12 {offsets = [0, 0], sizes = [8, 128], strides = [1, 1]} : vector<8x512xf32> to vector<8x128xf32>
    %14 = arith.negf %13 : vector<8x128xf32>
    %15 = math.exp %14 : vector<8x128xf32>
    %cst_13 = arith.constant 1.000000e+00 : f32
    %16 = vector.broadcast %cst_13 : f32 to vector<8x128xf32>
    %17 = arith.addf %16, %15 : vector<8x128xf32>
    %18 = arith.divf %16, %17 : vector<8x128xf32>
    %19 = vector.extract_strided_slice %12 {offsets = [0, 128], sizes = [8, 128], strides = [1, 1]} : vector<8x512xf32> to vector<8x128xf32>
    %20 = arith.negf %19 : vector<8x128xf32>
    %21 = math.exp %20 : vector<8x128xf32>
    %cst_14 = arith.constant 1.000000e+00 : f32
    %22 = vector.broadcast %cst_14 : f32 to vector<8x128xf32>
    %23 = arith.addf %22, %21 : vector<8x128xf32>
    %24 = arith.divf %22, %23 : vector<8x128xf32>
    %25 = vector.extract_strided_slice %12 {offsets = [0, 256], sizes = [8, 128], strides = [1, 1]} : vector<8x512xf32> to vector<8x128xf32>
    %26 = math.tanh %25 : vector<8x128xf32>
    %27 = vector.extract_strided_slice %12 {offsets = [0, 384], sizes = [8, 128], strides = [1, 1]} : vector<8x512xf32> to vector<8x128xf32>
    %28 = arith.negf %27 : vector<8x128xf32>
    %29 = math.exp %28 : vector<8x128xf32>
    %cst_15 = arith.constant 1.000000e+00 : f32
    %30 = vector.broadcast %cst_15 : f32 to vector<8x128xf32>
    %31 = arith.addf %30, %29 : vector<8x128xf32>
    %32 = arith.divf %30, %31 : vector<8x128xf32>
    %33 = arith.mulf %24, %5 : vector<8x128xf32>
    %34 = arith.mulf %18, %26 : vector<8x128xf32>
    %35 = arith.addf %33, %34 : vector<8x128xf32>
    %36 = math.tanh %35 : vector<8x128xf32>
    %37 = arith.mulf %32, %36 : vector<8x128xf32>
    %c1_i32 = arith.constant 1 : i32
    %38 = arith.index_cast %c1_i32 : i32 to index
    %c0_16 = arith.constant 0 : index
    %c0_17 = arith.constant 0 : index
    %39 = vector.load %arg0[%38, %c0_16, %c0_17] : memref<8x8x128xf32, #tpu.memory_space<vmem>>, vector<1x8x128xf32>
    %40 = vector.shape_cast %39 : vector<1x8x128xf32> to vector<8x128xf32>
    %41 = tpu.concatenate %40, %37 in 1 : vector<8x128xf32>, vector<8x128xf32> -> vector<8x256xf32>
    %cst_18 = arith.constant dense<0.000000e+00> : vector<8x512xf32>
    %42 = tpu.matmul %41, %0, %cst_18 {dimension_numbers = #tpu.dot_dimension_numbers<[1], [0], [0], [1], [0, 0, 1, 1], [], []>} : vector<8x256xf32>, vector<256x512xf32>, vector<8x512xf32> -> vector<8x512xf32>
    %43 = vector.broadcast %1 : vector<1x512xf32> to vector<8x512xf32>
    %44 = arith.addf %42, %43 : vector<8x512xf32>
    %45 = vector.extract_strided_slice %44 {offsets = [0, 0], sizes = [8, 128], strides = [1, 1]} : vector<8x512xf32> to vector<8x128xf32>
    %46 = arith.negf %45 : vector<8x128xf32>
    %47 = math.exp %46 : vector<8x128xf32>
    %cst_19 = arith.constant 1.000000e+00 : f32
    %48 = vector.broadcast %cst_19 : f32 to vector<8x128xf32>
    %49 = arith.addf %48, %47 : vector<8x128xf32>
    %50 = arith.divf %48, %49 : vector<8x128xf32>
    %51 = vector.extract_strided_slice %44 {offsets = [0, 128], sizes = [8, 128], strides = [1, 1]} : vector<8x512xf32> to vector<8x128xf32>
    %52 = arith.negf %51 : vector<8x128xf32>
    %53 = math.exp %52 : vector<8x128xf32>
    %cst_20 = arith.constant 1.000000e+00 : f32
    %54 = vector.broadcast %cst_20 : f32 to vector<8x128xf32>
    %55 = arith.addf %54, %53 : vector<8x128xf32>
    %56 = arith.divf %54, %55 : vector<8x128xf32>
    %57 = vector.extract_strided_slice %44 {offsets = [0, 256], sizes = [8, 128], strides = [1, 1]} : vector<8x512xf32> to vector<8x128xf32>
    %58 = math.tanh %57 : vector<8x128xf32>
    %59 = vector.extract_strided_slice %44 {offsets = [0, 384], sizes = [8, 128], strides = [1, 1]} : vector<8x512xf32> to vector<8x128xf32>
    %60 = arith.negf %59 : vector<8x128xf32>
    %61 = math.exp %60 : vector<8x128xf32>
    %cst_21 = arith.constant 1.000000e+00 : f32
    %62 = vector.broadcast %cst_21 : f32 to vector<8x128xf32>
    %63 = arith.addf %62, %61 : vector<8x128xf32>
    %64 = arith.divf %62, %63 : vector<8x128xf32>
    %65 = arith.mulf %56, %35 : vector<8x128xf32>
    %66 = arith.mulf %50, %58 : vector<8x128xf32>
    %67 = arith.addf %65, %66 : vector<8x128xf32>
    %68 = math.tanh %67 : vector<8x128xf32>
    %69 = arith.mulf %64, %68 : vector<8x128xf32>
    %c2_i32 = arith.constant 2 : i32
    %70 = arith.index_cast %c2_i32 : i32 to index
    %c0_22 = arith.constant 0 : index
    %c0_23 = arith.constant 0 : index
    %71 = vector.load %arg0[%70, %c0_22, %c0_23] : memref<8x8x128xf32, #tpu.memory_space<vmem>>, vector<1x8x128xf32>
    %72 = vector.shape_cast %71 : vector<1x8x128xf32> to vector<8x128xf32>
    %73 = tpu.concatenate %72, %69 in 1 : vector<8x128xf32>, vector<8x128xf32> -> vector<8x256xf32>
    %cst_24 = arith.constant dense<0.000000e+00> : vector<8x512xf32>
    %74 = tpu.matmul %73, %0, %cst_24 {dimension_numbers = #tpu.dot_dimension_numbers<[1], [0], [0], [1], [0, 0, 1, 1], [], []>} : vector<8x256xf32>, vector<256x512xf32>, vector<8x512xf32> -> vector<8x512xf32>
    %75 = vector.broadcast %1 : vector<1x512xf32> to vector<8x512xf32>
    %76 = arith.addf %74, %75 : vector<8x512xf32>
    %77 = vector.extract_strided_slice %76 {offsets = [0, 0], sizes = [8, 128], strides = [1, 1]} : vector<8x512xf32> to vector<8x128xf32>
    %78 = arith.negf %77 : vector<8x128xf32>
    %79 = math.exp %78 : vector<8x128xf32>
    %cst_25 = arith.constant 1.000000e+00 : f32
    %80 = vector.broadcast %cst_25 : f32 to vector<8x128xf32>
    %81 = arith.addf %80, %79 : vector<8x128xf32>
    %82 = arith.divf %80, %81 : vector<8x128xf32>
    %83 = vector.extract_strided_slice %76 {offsets = [0, 128], sizes = [8, 128], strides = [1, 1]} : vector<8x512xf32> to vector<8x128xf32>
    %84 = arith.negf %83 : vector<8x128xf32>
    %85 = math.exp %84 : vector<8x128xf32>
    %cst_26 = arith.constant 1.000000e+00 : f32
    %86 = vector.broadcast %cst_26 : f32 to vector<8x128xf32>
    %87 = arith.addf %86, %85 : vector<8x128xf32>
    %88 = arith.divf %86, %87 : vector<8x128xf32>
    %89 = vector.extract_strided_slice %76 {offsets = [0, 256], sizes = [8, 128], strides = [1, 1]} : vector<8x512xf32> to vector<8x128xf32>
    %90 = math.tanh %89 : vector<8x128xf32>
    %91 = vector.extract_strided_slice %76 {offsets = [0, 384], sizes = [8, 128], strides = [1, 1]} : vector<8x512xf32> to vector<8x128xf32>
    %92 = arith.negf %91 : vector<8x128xf32>
    %93 = math.exp %92 : vector<8x128xf32>
    %cst_27 = arith.constant 1.000000e+00 : f32
    %94 = vector.broadcast %cst_27 : f32 to vector<8x128xf32>
    %95 = arith.addf %94, %93 : vector<8x128xf32>
    %96 = arith.divf %94, %95 : vector<8x128xf32>
    %97 = arith.mulf %88, %67 : vector<8x128xf32>
    %98 = arith.mulf %82, %90 : vector<8x128xf32>
    %99 = arith.addf %97, %98 : vector<8x128xf32>
    %100 = math.tanh %99 : vector<8x128xf32>
    %101 = arith.mulf %96, %100 : vector<8x128xf32>
    %c3_i32 = arith.constant 3 : i32
    %102 = arith.index_cast %c3_i32 : i32 to index
    %c0_28 = arith.constant 0 : index
    %c0_29 = arith.constant 0 : index
    %103 = vector.load %arg0[%102, %c0_28, %c0_29] : memref<8x8x128xf32, #tpu.memory_space<vmem>>, vector<1x8x128xf32>
    %104 = vector.shape_cast %103 : vector<1x8x128xf32> to vector<8x128xf32>
    %105 = tpu.concatenate %104, %101 in 1 : vector<8x128xf32>, vector<8x128xf32> -> vector<8x256xf32>
    %cst_30 = arith.constant dense<0.000000e+00> : vector<8x512xf32>
    %106 = tpu.matmul %105, %0, %cst_30 {dimension_numbers = #tpu.dot_dimension_numbers<[1], [0], [0], [1], [0, 0, 1, 1], [], []>} : vector<8x256xf32>, vector<256x512xf32>, vector<8x512xf32> -> vector<8x512xf32>
    %107 = vector.broadcast %1 : vector<1x512xf32> to vector<8x512xf32>
    %108 = arith.addf %106, %107 : vector<8x512xf32>
    %109 = vector.extract_strided_slice %108 {offsets = [0, 0], sizes = [8, 128], strides = [1, 1]} : vector<8x512xf32> to vector<8x128xf32>
    %110 = arith.negf %109 : vector<8x128xf32>
    %111 = math.exp %110 : vector<8x128xf32>
    %cst_31 = arith.constant 1.000000e+00 : f32
    %112 = vector.broadcast %cst_31 : f32 to vector<8x128xf32>
    %113 = arith.addf %112, %111 : vector<8x128xf32>
    %114 = arith.divf %112, %113 : vector<8x128xf32>
    %115 = vector.extract_strided_slice %108 {offsets = [0, 128], sizes = [8, 128], strides = [1, 1]} : vector<8x512xf32> to vector<8x128xf32>
    %116 = arith.negf %115 : vector<8x128xf32>
    %117 = math.exp %116 : vector<8x128xf32>
    %cst_32 = arith.constant 1.000000e+00 : f32
    %118 = vector.broadcast %cst_32 : f32 to vector<8x128xf32>
    %119 = arith.addf %118, %117 : vector<8x128xf32>
    %120 = arith.divf %118, %119 : vector<8x128xf32>
    %121 = vector.extract_strided_slice %108 {offsets = [0, 256], sizes = [8, 128], strides = [1, 1]} : vector<8x512xf32> to vector<8x128xf32>
    %122 = math.tanh %121 : vector<8x128xf32>
    %123 = vector.extract_strided_slice %108 {offsets = [0, 384], sizes = [8, 128], strides = [1, 1]} : vector<8x512xf32> to vector<8x128xf32>
    %124 = arith.negf %123 : vector<8x128xf32>
    %125 = math.exp %124 : vector<8x128xf32>
    %cst_33 = arith.constant 1.000000e+00 : f32
    %126 = vector.broadcast %cst_33 : f32 to vector<8x128xf32>
    %127 = arith.addf %126, %125 : vector<8x128xf32>
    %128 = arith.divf %126, %127 : vector<8x128xf32>
    %129 = arith.mulf %120, %99 : vector<8x128xf32>
    %130 = arith.mulf %114, %122 : vector<8x128xf32>
    %131 = arith.addf %129, %130 : vector<8x128xf32>
    %132 = math.tanh %131 : vector<8x128xf32>
    %133 = arith.mulf %128, %132 : vector<8x128xf32>
    %c4_i32 = arith.constant 4 : i32
    %134 = arith.index_cast %c4_i32 : i32 to index
    %c0_34 = arith.constant 0 : index
    %c0_35 = arith.constant 0 : index
    %135 = vector.load %arg0[%134, %c0_34, %c0_35] : memref<8x8x128xf32, #tpu.memory_space<vmem>>, vector<1x8x128xf32>
    %136 = vector.shape_cast %135 : vector<1x8x128xf32> to vector<8x128xf32>
    %137 = tpu.concatenate %136, %133 in 1 : vector<8x128xf32>, vector<8x128xf32> -> vector<8x256xf32>
    %cst_36 = arith.constant dense<0.000000e+00> : vector<8x512xf32>
    %138 = tpu.matmul %137, %0, %cst_36 {dimension_numbers = #tpu.dot_dimension_numbers<[1], [0], [0], [1], [0, 0, 1, 1], [], []>} : vector<8x256xf32>, vector<256x512xf32>, vector<8x512xf32> -> vector<8x512xf32>
    %139 = vector.broadcast %1 : vector<1x512xf32> to vector<8x512xf32>
    %140 = arith.addf %138, %139 : vector<8x512xf32>
    %141 = vector.extract_strided_slice %140 {offsets = [0, 0], sizes = [8, 128], strides = [1, 1]} : vector<8x512xf32> to vector<8x128xf32>
    %142 = arith.negf %141 : vector<8x128xf32>
    %143 = math.exp %142 : vector<8x128xf32>
    %cst_37 = arith.constant 1.000000e+00 : f32
    %144 = vector.broadcast %cst_37 : f32 to vector<8x128xf32>
    %145 = arith.addf %144, %143 : vector<8x128xf32>
    %146 = arith.divf %144, %145 : vector<8x128xf32>
    %147 = vector.extract_strided_slice %140 {offsets = [0, 128], sizes = [8, 128], strides = [1, 1]} : vector<8x512xf32> to vector<8x128xf32>
    %148 = arith.negf %147 : vector<8x128xf32>
    %149 = math.exp %148 : vector<8x128xf32>
    %cst_38 = arith.constant 1.000000e+00 : f32
    %150 = vector.broadcast %cst_38 : f32 to vector<8x128xf32>
    %151 = arith.addf %150, %149 : vector<8x128xf32>
    %152 = arith.divf %150, %151 : vector<8x128xf32>
    %153 = vector.extract_strided_slice %140 {offsets = [0, 256], sizes = [8, 128], strides = [1, 1]} : vector<8x512xf32> to vector<8x128xf32>
    %154 = math.tanh %153 : vector<8x128xf32>
    %155 = vector.extract_strided_slice %140 {offsets = [0, 384], sizes = [8, 128], strides = [1, 1]} : vector<8x512xf32> to vector<8x128xf32>
    %156 = arith.negf %155 : vector<8x128xf32>
    %157 = math.exp %156 : vector<8x128xf32>
    %cst_39 = arith.constant 1.000000e+00 : f32
    %158 = vector.broadcast %cst_39 : f32 to vector<8x128xf32>
    %159 = arith.addf %158, %157 : vector<8x128xf32>
    %160 = arith.divf %158, %159 : vector<8x128xf32>
    %161 = arith.mulf %152, %131 : vector<8x128xf32>
    %162 = arith.mulf %146, %154 : vector<8x128xf32>
    %163 = arith.addf %161, %162 : vector<8x128xf32>
    %164 = math.tanh %163 : vector<8x128xf32>
    %165 = arith.mulf %160, %164 : vector<8x128xf32>
    %c5_i32 = arith.constant 5 : i32
    %166 = arith.index_cast %c5_i32 : i32 to index
    %c0_40 = arith.constant 0 : index
    %c0_41 = arith.constant 0 : index
    %167 = vector.load %arg0[%166, %c0_40, %c0_41] : memref<8x8x128xf32, #tpu.memory_space<vmem>>, vector<1x8x128xf32>
    %168 = vector.shape_cast %167 : vector<1x8x128xf32> to vector<8x128xf32>
    %169 = tpu.concatenate %168, %165 in 1 : vector<8x128xf32>, vector<8x128xf32> -> vector<8x256xf32>
    %cst_42 = arith.constant dense<0.000000e+00> : vector<8x512xf32>
    %170 = tpu.matmul %169, %0, %cst_42 {dimension_numbers = #tpu.dot_dimension_numbers<[1], [0], [0], [1], [0, 0, 1, 1], [], []>} : vector<8x256xf32>, vector<256x512xf32>, vector<8x512xf32> -> vector<8x512xf32>
    %171 = vector.broadcast %1 : vector<1x512xf32> to vector<8x512xf32>
    %172 = arith.addf %170, %171 : vector<8x512xf32>
    %173 = vector.extract_strided_slice %172 {offsets = [0, 0], sizes = [8, 128], strides = [1, 1]} : vector<8x512xf32> to vector<8x128xf32>
    %174 = arith.negf %173 : vector<8x128xf32>
    %175 = math.exp %174 : vector<8x128xf32>
    %cst_43 = arith.constant 1.000000e+00 : f32
    %176 = vector.broadcast %cst_43 : f32 to vector<8x128xf32>
    %177 = arith.addf %176, %175 : vector<8x128xf32>
    %178 = arith.divf %176, %177 : vector<8x128xf32>
    %179 = vector.extract_strided_slice %172 {offsets = [0, 128], sizes = [8, 128], strides = [1, 1]} : vector<8x512xf32> to vector<8x128xf32>
    %180 = arith.negf %179 : vector<8x128xf32>
    %181 = math.exp %180 : vector<8x128xf32>
    %cst_44 = arith.constant 1.000000e+00 : f32
    %182 = vector.broadcast %cst_44 : f32 to vector<8x128xf32>
    %183 = arith.addf %182, %181 : vector<8x128xf32>
    %184 = arith.divf %182, %183 : vector<8x128xf32>
    %185 = vector.extract_strided_slice %172 {offsets = [0, 256], sizes = [8, 128], strides = [1, 1]} : vector<8x512xf32> to vector<8x128xf32>
    %186 = math.tanh %185 : vector<8x128xf32>
    %187 = vector.extract_strided_slice %172 {offsets = [0, 384], sizes = [8, 128], strides = [1, 1]} : vector<8x512xf32> to vector<8x128xf32>
    %188 = arith.negf %187 : vector<8x128xf32>
    %189 = math.exp %188 : vector<8x128xf32>
    %cst_45 = arith.constant 1.000000e+00 : f32
    %190 = vector.broadcast %cst_45 : f32 to vector<8x128xf32>
    %191 = arith.addf %190, %189 : vector<8x128xf32>
    %192 = arith.divf %190, %191 : vector<8x128xf32>
    %193 = arith.mulf %184, %163 : vector<8x128xf32>
    %194 = arith.mulf %178, %186 : vector<8x128xf32>
    %195 = arith.addf %193, %194 : vector<8x128xf32>
    %196 = math.tanh %195 : vector<8x128xf32>
    %197 = arith.mulf %192, %196 : vector<8x128xf32>
    %c6_i32 = arith.constant 6 : i32
    %198 = arith.index_cast %c6_i32 : i32 to index
    %c0_46 = arith.constant 0 : index
    %c0_47 = arith.constant 0 : index
    %199 = vector.load %arg0[%198, %c0_46, %c0_47] : memref<8x8x128xf32, #tpu.memory_space<vmem>>, vector<1x8x128xf32>
    %200 = vector.shape_cast %199 : vector<1x8x128xf32> to vector<8x128xf32>
    %201 = tpu.concatenate %200, %197 in 1 : vector<8x128xf32>, vector<8x128xf32> -> vector<8x256xf32>
    %cst_48 = arith.constant dense<0.000000e+00> : vector<8x512xf32>
    %202 = tpu.matmul %201, %0, %cst_48 {dimension_numbers = #tpu.dot_dimension_numbers<[1], [0], [0], [1], [0, 0, 1, 1], [], []>} : vector<8x256xf32>, vector<256x512xf32>, vector<8x512xf32> -> vector<8x512xf32>
    %203 = vector.broadcast %1 : vector<1x512xf32> to vector<8x512xf32>
    %204 = arith.addf %202, %203 : vector<8x512xf32>
    %205 = vector.extract_strided_slice %204 {offsets = [0, 0], sizes = [8, 128], strides = [1, 1]} : vector<8x512xf32> to vector<8x128xf32>
    %206 = arith.negf %205 : vector<8x128xf32>
    %207 = math.exp %206 : vector<8x128xf32>
    %cst_49 = arith.constant 1.000000e+00 : f32
    %208 = vector.broadcast %cst_49 : f32 to vector<8x128xf32>
    %209 = arith.addf %208, %207 : vector<8x128xf32>
    %210 = arith.divf %208, %209 : vector<8x128xf32>
    %211 = vector.extract_strided_slice %204 {offsets = [0, 128], sizes = [8, 128], strides = [1, 1]} : vector<8x512xf32> to vector<8x128xf32>
    %212 = arith.negf %211 : vector<8x128xf32>
    %213 = math.exp %212 : vector<8x128xf32>
    %cst_50 = arith.constant 1.000000e+00 : f32
    %214 = vector.broadcast %cst_50 : f32 to vector<8x128xf32>
    %215 = arith.addf %214, %213 : vector<8x128xf32>
    %216 = arith.divf %214, %215 : vector<8x128xf32>
    %217 = vector.extract_strided_slice %204 {offsets = [0, 256], sizes = [8, 128], strides = [1, 1]} : vector<8x512xf32> to vector<8x128xf32>
    %218 = math.tanh %217 : vector<8x128xf32>
    %219 = vector.extract_strided_slice %204 {offsets = [0, 384], sizes = [8, 128], strides = [1, 1]} : vector<8x512xf32> to vector<8x128xf32>
    %220 = arith.negf %219 : vector<8x128xf32>
    %221 = math.exp %220 : vector<8x128xf32>
    %cst_51 = arith.constant 1.000000e+00 : f32
    %222 = vector.broadcast %cst_51 : f32 to vector<8x128xf32>
    %223 = arith.addf %222, %221 : vector<8x128xf32>
    %224 = arith.divf %222, %223 : vector<8x128xf32>
    %225 = arith.mulf %216, %195 : vector<8x128xf32>
    %226 = arith.mulf %210, %218 : vector<8x128xf32>
    %227 = arith.addf %225, %226 : vector<8x128xf32>
    %228 = math.tanh %227 : vector<8x128xf32>
    %229 = arith.mulf %224, %228 : vector<8x128xf32>
    %c7_i32 = arith.constant 7 : i32
    %230 = arith.index_cast %c7_i32 : i32 to index
    %c0_52 = arith.constant 0 : index
    %c0_53 = arith.constant 0 : index
    %231 = vector.load %arg0[%230, %c0_52, %c0_53] : memref<8x8x128xf32, #tpu.memory_space<vmem>>, vector<1x8x128xf32>
    %232 = vector.shape_cast %231 : vector<1x8x128xf32> to vector<8x128xf32>
    %233 = tpu.concatenate %232, %229 in 1 : vector<8x128xf32>, vector<8x128xf32> -> vector<8x256xf32>
    %cst_54 = arith.constant dense<0.000000e+00> : vector<8x512xf32>
    %234 = tpu.matmul %233, %0, %cst_54 {dimension_numbers = #tpu.dot_dimension_numbers<[1], [0], [0], [1], [0, 0, 1, 1], [], []>} : vector<8x256xf32>, vector<256x512xf32>, vector<8x512xf32> -> vector<8x512xf32>
    %235 = vector.broadcast %1 : vector<1x512xf32> to vector<8x512xf32>
    %236 = arith.addf %234, %235 : vector<8x512xf32>
    %237 = vector.extract_strided_slice %236 {offsets = [0, 0], sizes = [8, 128], strides = [1, 1]} : vector<8x512xf32> to vector<8x128xf32>
    %238 = arith.negf %237 : vector<8x128xf32>
    %239 = math.exp %238 : vector<8x128xf32>
    %cst_55 = arith.constant 1.000000e+00 : f32
    %240 = vector.broadcast %cst_55 : f32 to vector<8x128xf32>
    %241 = arith.addf %240, %239 : vector<8x128xf32>
    %242 = arith.divf %240, %241 : vector<8x128xf32>
    %243 = vector.extract_strided_slice %236 {offsets = [0, 128], sizes = [8, 128], strides = [1, 1]} : vector<8x512xf32> to vector<8x128xf32>
    %244 = arith.negf %243 : vector<8x128xf32>
    %245 = math.exp %244 : vector<8x128xf32>
    %cst_56 = arith.constant 1.000000e+00 : f32
    %246 = vector.broadcast %cst_56 : f32 to vector<8x128xf32>
    %247 = arith.addf %246, %245 : vector<8x128xf32>
    %248 = arith.divf %246, %247 : vector<8x128xf32>
    %249 = vector.extract_strided_slice %236 {offsets = [0, 256], sizes = [8, 128], strides = [1, 1]} : vector<8x512xf32> to vector<8x128xf32>
    %250 = math.tanh %249 : vector<8x128xf32>
    %251 = vector.extract_strided_slice %236 {offsets = [0, 384], sizes = [8, 128], strides = [1, 1]} : vector<8x512xf32> to vector<8x128xf32>
    %252 = arith.negf %251 : vector<8x128xf32>
    %253 = math.exp %252 : vector<8x128xf32>
    %cst_57 = arith.constant 1.000000e+00 : f32
    %254 = vector.broadcast %cst_57 : f32 to vector<8x128xf32>
    %255 = arith.addf %254, %253 : vector<8x128xf32>
    %256 = arith.divf %254, %255 : vector<8x128xf32>
    %257 = arith.mulf %248, %227 : vector<8x128xf32>
    %258 = arith.mulf %242, %250 : vector<8x128xf32>
    %259 = arith.addf %257, %258 : vector<8x128xf32>
    %260 = math.tanh %259 : vector<8x128xf32>
    %261 = arith.mulf %256, %260 : vector<8x128xf32>
    %c8_i32 = arith.constant 8 : i32
    %c0_58 = arith.constant 0 : index
    %c0_59 = arith.constant 0 : index
    %262 = vector.load %arg8[%c0_58, %c0_59] : memref<8x128xf32, #tpu.memory_space<vmem>>, vector<8x128xf32>
    tpu.vector_store %arg8[%c0_58, %c0_59], %261 {strides = array<i32>} : memref<8x128xf32, #tpu.memory_space<vmem>>, vector<8x128xf32>,
    %c0_60 = arith.constant 0 : index
    %c0_61 = arith.constant 0 : index
    %263 = vector.load %arg9[%c0_60, %c0_61] : memref<8x128xf32, #tpu.memory_space<vmem>>, vector<8x128xf32>
    tpu.vector_store %arg9[%c0_60, %c0_61], %259 {strides = array<i32>} : memref<8x128xf32, #tpu.memory_space<vmem>>, vector<8x128xf32>,
    %cst_62 = arith.constant dense<0.000000e+00> : vector<8x128xf32>
    %264 = tpu.matmul %261, %2, %cst_62 {dimension_numbers = #tpu.dot_dimension_numbers<[1], [0], [0], [1], [0, 0, 1, 1], [], []>} : vector<8x128xf32>, vector<128x128xf32>, vector<8x128xf32> -> vector<8x128xf32>
    %265 = vector.broadcast %3 : vector<1x128xf32> to vector<8x128xf32>
    %266 = arith.addf %264, %265 : vector<8x128xf32>
    %c0_63 = arith.constant 0 : index
    %c0_64 = arith.constant 0 : index
    %267 = vector.load %arg7[%c0_63, %c0_64] : memref<8x128xf32, #tpu.memory_space<vmem>>, vector<8x128xf32>
    tpu.vector_store %arg7[%c0_63, %c0_64], %266 {strides = array<i32>} : memref<8x128xf32, #tpu.memory_space<vmem>>, vector<8x128xf32>,
    return
  }
}

</mosaic_0001>

<llo_original>
// kernel: lstm_forward.1
$region0: #{lstm_forward.1}
  #allocation0 [shape = 'u32[]', space=smem, size = 0x4, offset = 0x4, fixed_abs, tag = 'smem constant byte address 0x4 - core index']
  #allocation1 [shape = 'u32[144,128]{1,0:T(1,128)}', space=vmem, size = 0x12000, scoped, tag = 'internal scratch']
  %s0 = inlined_call_operand.vmem [shape: f32[8,8,128], index: 0, kind: input, shape index: {}]
  %s1 = inlined_call_operand.vmem [shape: f32[8,128], index: 1, kind: input, shape index: {}]
  %s2 = inlined_call_operand.vmem [shape: f32[8,128], index: 2, kind: input, shape index: {}]
  %s3 = inlined_call_operand.vmem [shape: f32[256,512], index: 3, kind: input, shape index: {}]
  %s4 = inlined_call_operand.vmem [shape: f32[1,512], index: 4, kind: input, shape index: {}]
  %s5 = inlined_call_operand.vmem [shape: f32[128,128], index: 5, kind: input, shape index: {}]
  %s6 = inlined_call_operand.vmem [shape: f32[1,128], index: 6, kind: input, shape index: {}]
  %s7 = inlined_call_operand.vmem [shape: f32[8,128], index: 7, kind: output, shape index: {0}]
  %s8 = inlined_call_operand.vmem [shape: f32[8,128], index: 8, kind: output, shape index: {1}]
  %s9 = inlined_call_operand.vmem [shape: f32[8,128], index: 9, kind: output, shape index: {2}]
  %10 = xla_tuple %s7, %s8, %s9
  %s11 = sld [smem:[#allocation0]]
  $region54: #{lstm_forward.1} parent=0
    _
  %s13 = ssub.s32 1, %s11
  %s14 = scalar_select 0, %s13, %s11
  // Predicated region
  $region2: #{lstm_forward.1} parent=0 // pred_check
    _
  $region3: #{lstm_forward.1} parent=0 // pred_check_branch
    %16 = sbr.rel (0) target = $region5
  $region4: #{lstm_forward.1} parent=0 // pred_region
    _
  $region5: #{lstm_forward.1} parent=0 // pred_fallthru
    _
  // Predicated region
  $region6: #{lstm_forward.1} parent=0 // pred_check
    _
  $region7: #{lstm_forward.1} parent=0 // pred_check_branch
    %18 = sbr.rel (0) target = $region9
  $region8: #{lstm_forward.1} parent=0 // pred_region
    _
  $region9: #{lstm_forward.1} parent=0 // pred_fallthru
    _
  // Predicated region
  $region10: #{lstm_forward.1} parent=0 // pred_check
    _
  $region11: #{lstm_forward.1} parent=0 // pred_check_branch
    %20 = sbr.rel (0) target = $region13
  $region12: #{lstm_forward.1} parent=0 // pred_region
    _
  $region13: #{lstm_forward.1} parent=0 // pred_fallthru
    _
  // Predicated region
  $region14: #{lstm_forward.1} parent=0 // pred_check
    _
  $region15: #{lstm_forward.1} parent=0 // pred_check_branch
    %22 = sbr.rel (0) target = $region17
  $region16: #{lstm_forward.1} parent=0 // pred_region
    _
  $region17: #{lstm_forward.1} parent=0 // pred_fallthru
    _
  // Predicated region
  $region18: #{lstm_forward.1} parent=0 // pred_check
    _
  $region19: #{lstm_forward.1} parent=0 // pred_check_branch
    %24 = sbr.rel (0) target = $region21
  $region20: #{lstm_forward.1} parent=0 // pred_region
    _
  $region21: #{lstm_forward.1} parent=0 // pred_fallthru
    _
  // Predicated region
  $region22: #{lstm_forward.1} parent=0 // pred_check
    _
  $region23: #{lstm_forward.1} parent=0 // pred_check_branch
    %26 = sbr.rel (0) target = $region25
  $region24: #{lstm_forward.1} parent=0 // pred_region
    _
  $region25: #{lstm_forward.1} parent=0 // pred_fallthru
    _
  // Predicated region
  $region26: #{lstm_forward.1} parent=0 // pred_check
    _
  $region27: #{lstm_forward.1} parent=0 // pred_check_branch
    %28 = sbr.rel (0) target = $region29
  $region28: #{lstm_forward.1} parent=0 // pred_region
    _
  $region29: #{lstm_forward.1} parent=0 // pred_fallthru
    _
  %v29 = vld [vmem:[%s3] sm:$0xff]
  %v30 = vld [vmem:[%s3 + $0x8] sm:$0xff]
  %v31 = vld [vmem:[%s3 + $0x10] sm:$0xff]
  %v32 = vld [vmem:[%s3 + $0x18] sm:$0xff]
  %v33 = vld [vmem:[%s3 + $0x20] sm:$0xff]
  %v34 = vld [vmem:[%s3 + $0x28] sm:$0xff]
  %v35 = vld [vmem:[%s3 + $0x30] sm:$0xff]
  %v36 = vld [vmem:[%s3 + $0x38] sm:$0xff]
  %v37 = vld [vmem:[%s3 + $0x40] sm:$0xff]
  %v38 = vld [vmem:[%s3 + $0x48] sm:$0xff]
  %v39 = vld [vmem:[%s3 + $0x50] sm:$0xff]
  %v40 = vld [vmem:[%s3 + $0x58] sm:$0xff]
  %v41 = vld [vmem:[%s3 + $0x60] sm:$0xff]
  %v42 = vld [vmem:[%s3 + $0x68] sm:$0xff]
  %v43 = vld [vmem:[%s3 + $0x70] sm:$0xff]
  %v44 = vld [vmem:[%s3 + $0x78] sm:$0xff]
  %v45 = vld [vmem:[%s3 + $0x80] sm:$0xff]
  %v46 = vld [vmem:[%s3 + $0x88] sm:$0xff]
  %v47 = vld [vmem:[%s3 + $0x90] sm:$0xff]
  %v48 = vld [vmem:[%s3 + $0x98] sm:$0xff]
  %v49 = vld [vmem:[%s3 + $0xa0] sm:$0xff]
  %v50 = vld [vmem:[%s3 + $0xa8] sm:$0xff]
  %v51 = vld [vmem:[%s3 + $0xb0] sm:$0xff]
  %v52 = vld [vmem:[%s3 + $0xb8] sm:$0xff]
  %v53 = vld [vmem:[%s3 + $0xc0] sm:$0xff]
  %v54 = vld [vmem:[%s3 + $0xc8] sm:$0xff]
  %v55 = vld [vmem:[%s3 + $0xd0] sm:$0xff]
  %v56 = vld [vmem:[%s3 + $0xd8] sm:$0xff]
  %v57 = vld [vmem:[%s3 + $0xe0] sm:$0xff]
  %v58 = vld [vmem:[%s3 + $0xe8] sm:$0xff]
  %v59 = vld [vmem:[%s3 + $0xf0] sm:$0xff]
  %v60 = vld [vmem:[%s3 + $0xf8] sm:$0xff]
  %v61 = vld [vmem:[%s3 + $0x100] sm:$0xff]
  %v62 = vld [vmem:[%s3 + $0x108] sm:$0xff]
  %v63 = vld [vmem:[%s3 + $0x110] sm:$0xff]
  %v64 = vld [vmem:[%s3 + $0x118] sm:$0xff]
  %v65 = vld [vmem:[%s3 + $0x120] sm:$0xff]
  %v66 = vld [vmem:[%s3 + $0x128] sm:$0xff]
  %v67 = vld [vmem:[%s3 + $0x130] sm:$0xff]
  %v68 = vld [vmem:[%s3 + $0x138] sm:$0xff]
  %v69 = vld [vmem:[%s3 + $0x140] sm:$0xff]
  %v70 = vld [vmem:[%s3 + $0x148] sm:$0xff]
  %v71 = vld [vmem:[%s3 + $0x150] sm:$0xff]
  %v72 = vld [vmem:[%s3 + $0x158] sm:$0xff]
  %v73 = vld [vmem:[%s3 + $0x160] sm:$0xff]
  %v74 = vld [vmem:[%s3 + $0x168] sm:$0xff]
  %v75 = vld [vmem:[%s3 + $0x170] sm:$0xff]
  %v76 = vld [vmem:[%s3 + $0x178] sm:$0xff]
  %v77 = vld [vmem:[%s3 + $0x180] sm:$0xff]
  %v78 = vld [vmem:[%s3 + $0x188] sm:$0xff]
  %v79 = vld [vmem:[%s3 + $0x190] sm:$0xff]
  %v80 = vld [vmem:[%s3 + $0x198] sm:$0xff]
  %v81 = vld [vmem:[%s3 + $0x1a0] sm:$0xff]
  %v82 = vld [vmem:[%s3 + $0x1a8] sm:$0xff]
  %v83 = vld [vmem:[%s3 + $0x1b0] sm:$0xff]
  %v84 = vld [vmem:[%s3 + $0x1b8] sm:$0xff]
  %v85 = vld [vmem:[%s3 + $0x1c0] sm:$0xff]
  %v86 = vld [vmem:[%s3 + $0x1c8] sm:$0xff]
  %v87 = vld [vmem:[%s3 + $0x1d0] sm:$0xff]
  %v88 = vld [vmem:[%s3 + $0x1d8] sm:$0xff]
  %v89 = vld [vmem:[%s3 + $0x1e0] sm:$0xff]
  %v90 = vld [vmem:[%s3 + $0x1e8] sm:$0xff]
  %v91 = vld [vmem:[%s3 + $0x1f0] sm:$0xff]
  %v92 = vld [vmem:[%s3 + $0x1f8] sm:$0xff]
  %v93 = vld [vmem:[%s3 + $0x200] sm:$0xff]
  %v94 = vld [vmem:[%s3 + $0x208] sm:$0xff]
  %v95 = vld [vmem:[%s3 + $0x210] sm:$0xff]
  %v96 = vld [vmem:[%s3 + $0x218] sm:$0xff]
  %v97 = vld [vmem:[%s3 + $0x220] sm:$0xff]
  %v98 = vld [vmem:[%s3 + $0x228] sm:$0xff]
  %v99 = vld [vmem:[%s3 + $0x230] sm:$0xff]
  %v100 = vld [vmem:[%s3 + $0x238] sm:$0xff]
  %v101 = vld [vmem:[%s3 + $0x240] sm:$0xff]
  %v102 = vld [vmem:[%s3 + $0x248] sm:$0xff]
  %v103 = vld [vmem:[%s3 + $0x250] sm:$0xff]
  %v104 = vld [vmem:[%s3 + $0x258] sm:$0xff]
  %v105 = vld [vmem:[%s3 + $0x260] sm:$0xff]
  %v106 = vld [vmem:[%s3 + $0x268] sm:$0xff]
  %v107 = vld [vmem:[%s3 + $0x270] sm:$0xff]
  %v108 = vld [vmem:[%s3 + $0x278] sm:$0xff]
  %v109 = vld [vmem:[%s3 + $0x280] sm:$0xff]
  %v110 = vld [vmem:[%s3 + $0x288] sm:$0xff]
  %v111 = vld [vmem:[%s3 + $0x290] sm:$0xff]
  %v112 = vld [vmem:[%s3 + $0x298] sm:$0xff]
  %v113 = vld [vmem:[%s3 + $0x2a0] sm:$0xff]
  %v114 = vld [vmem:[%s3 + $0x2a8] sm:$0xff]
  %v115 = vld [vmem:[%s3 + $0x2b0] sm:$0xff]
  %v116 = vld [vmem:[%s3 + $0x2b8] sm:$0xff]
  %v117 = vld [vmem:[%s3 + $0x2c0] sm:$0xff]
  %v118 = vld [vmem:[%s3 + $0x2c8] sm:$0xff]
  %v119 = vld [vmem:[%s3 + $0x2d0] sm:$0xff]
  %v120 = vld [vmem:[%s3 + $0x2d8] sm:$0xff]
  %v121 = vld [vmem:[%s3 + $0x2e0] sm:$0xff]
  %v122 = vld [vmem:[%s3 + $0x2e8] sm:$0xff]
  %v123 = vld [vmem:[%s3 + $0x2f0] sm:$0xff]
  %v124 = vld [vmem:[%s3 + $0x2f8] sm:$0xff]
  %v125 = vld [vmem:[%s3 + $0x300] sm:$0xff]
  %v126 = vld [vmem:[%s3 + $0x308] sm:$0xff]
  %v127 = vld [vmem:[%s3 + $0x310] sm:$0xff]
  %v128 = vld [vmem:[%s3 + $0x318] sm:$0xff]
  %v129 = vld [vmem:[%s3 + $0x320] sm:$0xff]
  %v130 = vld [vmem:[%s3 + $0x328] sm:$0xff]
  %v131 = vld [vmem:[%s3 + $0x330] sm:$0xff]
  %v132 = vld [vmem:[%s3 + $0x338] sm:$0xff]
  %v133 = vld [vmem:[%s3 + $0x340] sm:$0xff]
  %v134 = vld [vmem:[%s3 + $0x348] sm:$0xff]
  %v135 = vld [vmem:[%s3 + $0x350] sm:$0xff]
  %v136 = vld [vmem:[%s3 + $0x358] sm:$0xff]
  %v137 = vld [vmem:[%s3 + $0x360] sm:$0xff]
  %v138 = vld [vmem:[%s3 + $0x368] sm:$0xff]
  %v139 = vld [vmem:[%s3 + $0x370] sm:$0xff]
  %v140 = vld [vmem:[%s3 + $0x378] sm:$0xff]
  %v141 = vld [vmem:[%s3 + $0x380] sm:$0xff]
  %v142 = vld [vmem:[%s3 + $0x388] sm:$0xff]
  %v143 = vld [vmem:[%s3 + $0x390] sm:$0xff]
  %v144 = vld [vmem:[%s3 + $0x398] sm:$0xff]
  %v145 = vld [vmem:[%s3 + $0x3a0] sm:$0xff]
  %v146 = vld [vmem:[%s3 + $0x3a8] sm:$0xff]
  %v147 = vld [vmem:[%s3 + $0x3b0] sm:$0xff]
  %v148 = vld [vmem:[%s3 + $0x3b8] sm:$0xff]
  %v149 = vld [vmem:[%s3 + $0x3c0] sm:$0xff]
  %v150 = vld [vmem:[%s3 + $0x3c8] sm:$0xff]
  %v151 = vld [vmem:[%s3 + $0x3d0] sm:$0xff]
  %v152 = vld [vmem:[%s3 + $0x3d8] sm:$0xff]
  %v153 = vld [vmem:[%s3 + $0x3e0] sm:$0xff]
  %v154 = vld [vmem:[%s3 + $0x3e8] sm:$0xff]
  %v155 = vld [vmem:[%s3 + $0x3f0] sm:$0xff]
  %v156 = vld [vmem:[%s3 + $0x3f8] sm:$0xff]
  %v157 = vld [vmem:[%s4] sm:$0xf]
  %v158 = vld [vmem:[%s5] sm:$0xff]
  %v159 = vld [vmem:[%s5 + $0x8] sm:$0xff]
  %v160 = vld [vmem:[%s5 + $0x10] sm:$0xff]
  %v161 = vld [vmem:[%s5 + $0x18] sm:$0xff]
  %v162 = vld [vmem:[%s5 + $0x20] sm:$0xff]
  %v163 = vld [vmem:[%s5 + $0x28] sm:$0xff]
  %v164 = vld [vmem:[%s5 + $0x30] sm:$0xff]
  %v165 = vld [vmem:[%s5 + $0x38] sm:$0xff]
  %v166 = vld [vmem:[%s5 + $0x40] sm:$0xff]
  %v167 = vld [vmem:[%s5 + $0x48] sm:$0xff]
  %v168 = vld [vmem:[%s5 + $0x50] sm:$0xff]
  %v169 = vld [vmem:[%s5 + $0x58] sm:$0xff]
  %v170 = vld [vmem:[%s5 + $0x60] sm:$0xff]
  %v171 = vld [vmem:[%s5 + $0x68] sm:$0xff]
  %v172 = vld [vmem:[%s5 + $0x70] sm:$0xff]
  %v173 = vld [vmem:[%s5 + $0x78] sm:$0xff]
  %v174 = vld [vmem:[%s6] sm:$0x1]
  %v175 = vld [vmem:[%s1] sm:$0xff]
  %v176 = vld [vmem:[%s2] sm:$0xff]
  %v177 = vld [vmem:[%s0] sm:$0xff]
  %v179 = vlaneseq
  %v180 = vshrl.u32 %v179, 7
  %v181 = vsub.s32 0, %v180
  %v182 = vrot.slane %v157, %v181
  %v183 = vlaneseq
  %v184 = vshrl.u32 %v183, 7
  %v185 = vsub.s32 1, %v184
  %v186 = vrot.slane %v157, %v185
  %v187 = vlaneseq
  %v188 = vshrl.u32 %v187, 7
  %v189 = vsub.s32 2, %v188
  %v190 = vrot.slane %v157, %v189
  %v191 = vlaneseq
  %v192 = vshrl.u32 %v191, 7
  %v193 = vsub.s32 3, %v192
  %v194 = vrot.slane %v157, %v193
  %199 = vmatprep.subr.mxu0 %v30
  %200 = vmatpush1.msra.mxu0 %v29
  %201 = vmatprep.subr.mxu0 %v34
  %202 = vmatpush1.msra.mxu0 %v33
  %203 = vmatprep.subr.mxu0 %v38
  %204 = vmatpush1.msra.mxu0 %v37
  %205 = vmatprep.subr.mxu0 %v42
  %206 = vmatpush1.msra.mxu0 %v41
  %207 = vmatprep.subr.mxu0 %v46
  %208 = vmatpush1.msra.mxu0 %v45
  %209 = vmatprep.subr.mxu0 %v50
  %210 = vmatpush1.msra.mxu0 %v49
  %211 = vmatprep.subr.mxu0 %v54
  %212 = vmatpush1.msra.mxu0 %v53
  %213 = vmatprep.subr.mxu0 %v58
  %214 = vmatpush1.msra.mxu0 %v57
  %215 = vmatprep.subr.mxu0 %v62
  %216 = vmatpush1.msra.mxu0 %v61
  %217 = vmatprep.subr.mxu0 %v66
  %218 = vmatpush1.msra.mxu0 %v65
  %219 = vmatprep.subr.mxu0 %v70
  %220 = vmatpush1.msra.mxu0 %v69
  %221 = vmatprep.subr.mxu0 %v74
  %222 = vmatpush1.msra.mxu0 %v73
  %223 = vmatprep.subr.mxu0 %v78
  %224 = vmatpush1.msra.mxu0 %v77
  %225 = vmatprep.subr.mxu0 %v82
  %226 = vmatpush1.msra.mxu0 %v81
  %227 = vmatprep.subr.mxu0 %v86
  %228 = vmatpush1.msra.mxu0 %v85
  %229 = vmatprep.subr.mxu0 %v90
  %230 = vmatpush1.msra.mxu0 %v89
  %231 = vmatprep.subr.mxu0 %v94
  %232 = vmatpush1.msra.mxu0 %v93
  %233 = vmatprep.subr.mxu0 %v98
  %234 = vmatpush1.msra.mxu0 %v97
  %235 = vmatprep.subr.mxu0 %v102
  %236 = vmatpush1.msra.mxu0 %v101
  %237 = vmatprep.subr.mxu0 %v106
  %238 = vmatpush1.msra.mxu0 %v105
  %239 = vmatprep.subr.mxu0 %v110
  %240 = vmatpush1.msra.mxu0 %v109
  %241 = vmatprep.subr.mxu0 %v114
  %242 = vmatpush1.msra.mxu0 %v113
  %243 = vmatprep.subr.mxu0 %v118
  %244 = vmatpush1.msra.mxu0 %v117
  %245 = vmatprep.subr.mxu0 %v122
  %246 = vmatpush1.msra.mxu0 %v121
  %247 = vmatprep.subr.mxu0 %v126
  %248 = vmatpush1.msra.mxu0 %v125
  %249 = vmatprep.subr.mxu0 %v130
  %250 = vmatpush1.msra.mxu0 %v129
  %251 = vmatprep.subr.mxu0 %v134
  %252 = vmatpush1.msra.mxu0 %v133
  %253 = vmatprep.subr.mxu0 %v138
  %254 = vmatpush1.msra.mxu0 %v137
  %255 = vmatprep.subr.mxu0 %v142
  %256 = vmatpush1.msra.mxu0 %v141
  %257 = vmatprep.subr.mxu0 %v146
  %258 = vmatpush1.msra.mxu0 %v145
  %259 = vmatprep.subr.mxu0 %v150
  %260 = vmatpush1.msra.mxu0 %v149
  %261 = vmatprep.subr.mxu0 %v154
  %262 = vmatpush1.msra.mxu0 %v153
  %263 = vmatprep.mubr.f32.mxu0 %v175
  %264 = vmatmul.mubr.f32.gmra.mrb[0].mxu0 %v177
  %v265 = vpop.f32.mrb[0].mxu0
  %v266 = vadd.f32 %v182, %v265
  %v267 = vpop.f32.mrb[0].mxu0
  %v268 = vadd.f32 %v186, %v267
  %269 = vdwg.mxu0
  %270 = vmatprep.subr.mxu0 %v32
  %271 = vmatpush1.msra.mxu0 %v31
  %272 = vmatprep.subr.mxu0 %v36
  %273 = vmatpush1.msra.mxu0 %v35
  %274 = vmatprep.subr.mxu0 %v40
  %275 = vmatpush1.msra.mxu0 %v39
  %276 = vmatprep.subr.mxu0 %v44
  %277 = vmatpush1.msra.mxu0 %v43
  %278 = vmatprep.subr.mxu0 %v48
  %279 = vmatpush1.msra.mxu0 %v47
  %280 = vmatprep.subr.mxu0 %v52
  %281 = vmatpush1.msra.mxu0 %v51
  %282 = vmatprep.subr.mxu0 %v56
  %283 = vmatpush1.msra.mxu0 %v55
  %284 = vmatprep.subr.mxu0 %v60
  %285 = vmatpush1.msra.mxu0 %v59
  %286 = vmatprep.subr.mxu0 %v64
  %287 = vmatpush1.msra.mxu0 %v63
  %288 = vmatprep.subr.mxu0 %v68
  %289 = vmatpush1.msra.mxu0 %v67
  %290 = vmatprep.subr.mxu0 %v72
  %291 = vmatpush1.msra.mxu0 %v71
  %292 = vmatprep.subr.mxu0 %v76
  %293 = vmatpush1.msra.mxu0 %v75
  %294 = vmatprep.subr.mxu0 %v80
  %295 = vmatpush1.msra.mxu0 %v79
  %296 = vmatprep.subr.mxu0 %v84
  %297 = vmatpush1.msra.mxu0 %v83
  %298 = vmatprep.subr.mxu0 %v88
  %299 = vmatpush1.msra.mxu0 %v87
  %300 = vmatprep.subr.mxu0 %v92
  %301 = vmatpush1.msra.mxu0 %v91
  %302 = vmatprep.subr.mxu0 %v96
  %303 = vmatpush1.msra.mxu0 %v95
  %304 = vmatprep.subr.mxu0 %v100
  %305 = vmatpush1.msra.mxu0 %v99
  %306 = vmatprep.subr.mxu0 %v104
  %307 = vmatpush1.msra.mxu0 %v103
  %308 = vmatprep.subr.mxu0 %v108
  %309 = vmatpush1.msra.mxu0 %v107
  %310 = vmatprep.subr.mxu0 %v112
  %311 = vmatpush1.msra.mxu0 %v111
  %312 = vmatprep.subr.mxu0 %v116
  %313 = vmatpush1.msra.mxu0 %v115
  %314 = vmatprep.subr.mxu0 %v120
  %315 = vmatpush1.msra.mxu0 %v119
  %316 = vmatprep.subr.mxu0 %v124
  %317 = vmatpush1.msra.mxu0 %v123
  %318 = vmatprep.subr.mxu0 %v128
  %319 = vmatpush1.msra.mxu0 %v127
  %320 = vmatprep.subr.mxu0 %v132
  %321 = vmatpush1.msra.mxu0 %v131
  %322 = vmatprep.subr.mxu0 %v136
  %323 = vmatpush1.msra.mxu0 %v135
  %324 = vmatprep.subr.mxu0 %v140
  %325 = vmatpush1.msra.mxu0 %v139
  %326 = vmatprep.subr.mxu0 %v144
  %327 = vmatpush1.msra.mxu0 %v143
  %328 = vmatprep.subr.mxu0 %v148
  %329 = vmatpush1.msra.mxu0 %v147
  %330 = vmatprep.subr.mxu0 %v152
  %331 = vmatpush1.msra.mxu0 %v151
  %332 = vmatprep.subr.mxu0 %v156
  %333 = vmatpush1.msra.mxu0 %v155
  %334 = vmatprep.mubr.f32.mxu0 %v175
  %335 = vmatmul.mubr.f32.gmra.mrb[0].mxu0 %v177
  %v336 = vpop.f32.mrb[0].mxu0
  %v337 = vadd.f32 %v190, %v336
  %v338 = vpop.f32.mrb[0].mxu0
  %v339 = vadd.f32 %v194, %v338
  %340 = vdwg.mxu0
  %v341 = vxor.u32 %v266, 2147483648
  %v342 = vmul.f32 %v341, 1.442695
  %v343 = vpow.pop %v342
  %v344 = vadd.f32 %v343, 1.0
  %v345 = vrcp.pop %v344
  %v346 = vmul.f32 1.0, %v345
  %v347 = vxor.u32 %v268, 2147483648
  %v348 = vmul.f32 %v347, 1.442695
  %v349 = vpow.pop %v348
  %v350 = vadd.f32 %v349, 1.0
  %v351 = vrcp.pop %v350
  %v352 = vmul.f32 1.0, %v351
  %v353 = vtanh.pop %v337
  %v354 = vxor.u32 %v339, 2147483648
  %v355 = vmul.f32 %v354, 1.442695
  %v356 = vpow.pop %v355
  %v357 = vadd.f32 %v356, 1.0
  %v358 = vrcp.pop %v357
  %v359 = vmul.f32 1.0, %v358
  %v360 = vmul.f32 %v352, %v176
  %v361 = vmul.f32 %v346, %v353
  %v362 = vadd.f32 %v360, %v361
  %v363 = vtanh.pop %v362
  %v364 = vmul.f32 %v359, %v363
  %s365 = scalar_lea.vmem %s0, 8
  %v366 = vld [vmem:[%s365] sm:$0xff]
  %367 = vmatprep.subr.mxu0 %v30
  %368 = vmatpush1.msra.mxu0 %v29
  %369 = vmatprep.subr.mxu0 %v34
  %370 = vmatpush1.msra.mxu0 %v33
  %371 = vmatprep.subr.mxu0 %v38
  %372 = vmatpush1.msra.mxu0 %v37
  %373 = vmatprep.subr.mxu0 %v42
  %374 = vmatpush1.msra.mxu0 %v41
  %375 = vmatprep.subr.mxu0 %v46
  %376 = vmatpush1.msra.mxu0 %v45
  %377 = vmatprep.subr.mxu0 %v50
  %378 = vmatpush1.msra.mxu0 %v49
  %379 = vmatprep.subr.mxu0 %v54
  %380 = vmatpush1.msra.mxu0 %v53
  %381 = vmatprep.subr.mxu0 %v58
  %382 = vmatpush1.msra.mxu0 %v57
  %383 = vmatprep.subr.mxu0 %v62
  %384 = vmatpush1.msra.mxu0 %v61
  %385 = vmatprep.subr.mxu0 %v66
  %386 = vmatpush1.msra.mxu0 %v65
  %387 = vmatprep.subr.mxu0 %v70
  %388 = vmatpush1.msra.mxu0 %v69
  %389 = vmatprep.subr.mxu0 %v74
  %390 = vmatpush1.msra.mxu0 %v73
  %391 = vmatprep.subr.mxu0 %v78
  %392 = vmatpush1.msra.mxu0 %v77
  %393 = vmatprep.subr.mxu0 %v82
  %394 = vmatpush1.msra.mxu0 %v81
  %395 = vmatprep.subr.mxu0 %v86
  %396 = vmatpush1.msra.mxu0 %v85
  %397 = vmatprep.subr.mxu0 %v90
  %398 = vmatpush1.msra.mxu0 %v89
  %399 = vmatprep.subr.mxu0 %v94
  %400 = vmatpush1.msra.mxu0 %v93
  %401 = vmatprep.subr.mxu0 %v98
  %402 = vmatpush1.msra.mxu0 %v97
  %403 = vmatprep.subr.mxu0 %v102
  %404 = vmatpush1.msra.mxu0 %v101
  %405 = vmatprep.subr.mxu0 %v106
  %406 = vmatpush1.msra.mxu0 %v105
  %407 = vmatprep.subr.mxu0 %v110
  %408 = vmatpush1.msra.mxu0 %v109
  %409 = vmatprep.subr.mxu0 %v114
  %410 = vmatpush1.msra.mxu0 %v113
  %411 = vmatprep.subr.mxu0 %v118
  %412 = vmatpush1.msra.mxu0 %v117
  %413 = vmatprep.subr.mxu0 %v122
  %414 = vmatpush1.msra.mxu0 %v121
  %415 = vmatprep.subr.mxu0 %v126
  %416 = vmatpush1.msra.mxu0 %v125
  %417 = vmatprep.subr.mxu0 %v130
  %418 = vmatpush1.msra.mxu0 %v129
  %419 = vmatprep.subr.mxu0 %v134
  %420 = vmatpush1.msra.mxu0 %v133
  %421 = vmatprep.subr.mxu0 %v138
  %422 = vmatpush1.msra.mxu0 %v137
  %423 = vmatprep.subr.mxu0 %v142
  %424 = vmatpush1.msra.mxu0 %v141
  %425 = vmatprep.subr.mxu0 %v146
  %426 = vmatpush1.msra.mxu0 %v145
  %427 = vmatprep.subr.mxu0 %v150
  %428 = vmatpush1.msra.mxu0 %v149
  %429 = vmatprep.subr.mxu0 %v154
  %430 = vmatpush1.msra.mxu0 %v153
  %431 = vmatprep.mubr.f32.mxu0 %v364
  %432 = vmatmul.mubr.f32.gmra.mrb[0].mxu0 %v366
  %v433 = vpop.f32.mrb[0].mxu0
  %v434 = vadd.f32 %v182, %v433
  %v435 = vpop.f32.mrb[0].mxu0
  %v436 = vadd.f32 %v186, %v435
  %437 = vdwg.mxu0
  %438 = vmatprep.subr.mxu0 %v32
  %439 = vmatpush1.msra.mxu0 %v31
  %440 = vmatprep.subr.mxu0 %v36
  %441 = vmatpush1.msra.mxu0 %v35
  %442 = vmatprep.subr.mxu0 %v40
  %443 = vmatpush1.msra.mxu0 %v39
  %444 = vmatprep.subr.mxu0 %v44
  %445 = vmatpush1.msra.mxu0 %v43
  %446 = vmatprep.subr.mxu0 %v48
  %447 = vmatpush1.msra.mxu0 %v47
  %448 = vmatprep.subr.mxu0 %v52
  %449 = vmatpush1.msra.mxu0 %v51
  %450 = vmatprep.subr.mxu0 %v56
  %451 = vmatpush1.msra.mxu0 %v55
  %452 = vmatprep.subr.mxu0 %v60
  %453 = vmatpush1.msra.mxu0 %v59
  %454 = vmatprep.subr.mxu0 %v64
  %455 = vmatpush1.msra.mxu0 %v63
  %456 = vmatprep.subr.mxu0 %v68
  %457 = vmatpush1.msra.mxu0 %v67
  %458 = vmatprep.subr.mxu0 %v72
  %459 = vmatpush1.msra.mxu0 %v71
  %460 = vmatprep.subr.mxu0 %v76
  %461 = vmatpush1.msra.mxu0 %v75
  %462 = vmatprep.subr.mxu0 %v80
  %463 = vmatpush1.msra.mxu0 %v79
  %464 = vmatprep.subr.mxu0 %v84
  %465 = vmatpush1.msra.mxu0 %v83
  %466 = vmatprep.subr.mxu0 %v88
  %467 = vmatpush1.msra.mxu0 %v87
  %468 = vmatprep.subr.mxu0 %v92
  %469 = vmatpush1.msra.mxu0 %v91
  %470 = vmatprep.subr.mxu0 %v96
  %471 = vmatpush1.msra.mxu0 %v95
  %472 = vmatprep.subr.mxu0 %v100
  %473 = vmatpush1.msra.mxu0 %v99
  %474 = vmatprep.subr.mxu0 %v104
  %475 = vmatpush1.msra.mxu0 %v103
  %476 = vmatprep.subr.mxu0 %v108
  %477 = vmatpush1.msra.mxu0 %v107
  %478 = vmatprep.subr.mxu0 %v112
  %479 = vmatpush1.msra.mxu0 %v111
  %480 = vmatprep.subr.mxu0 %v116
  %481 = vmatpush1.msra.mxu0 %v115
  %482 = vmatprep.subr.mxu0 %v120
  %483 = vmatpush1.msra.mxu0 %v119
  %484 = vmatprep.subr.mxu0 %v124
  %485 = vmatpush1.msra.mxu0 %v123
  %486 = vmatprep.subr.mxu0 %v128
  %487 = vmatpush1.msra.mxu0 %v127
  %488 = vmatprep.subr.mxu0 %v132
  %489 = vmatpush1.msra.mxu0 %v131
  %490 = vmatprep.subr.mxu0 %v136
  %491 = vmatpush1.msra.mxu0 %v135
  %492 = vmatprep.subr.mxu0 %v140
  %493 = vmatpush1.msra.mxu0 %v139
  %494 = vmatprep.subr.mxu0 %v144
  %495 = vmatpush1.msra.mxu0 %v143
  %496 = vmatprep.subr.mxu0 %v148
  %497 = vmatpush1.msra.mxu0 %v147
  %498 = vmatprep.subr.mxu0 %v152
  %499 = vmatpush1.msra.mxu0 %v151
  %500 = vmatprep.subr.mxu0 %v156
  %501 = vmatpush1.msra.mxu0 %v155
  %502 = vmatprep.mubr.f32.mxu0 %v364
  %503 = vmatmul.mubr.f32.gmra.mrb[0].mxu0 %v366
  %v504 = vpop.f32.mrb[0].mxu0
  %v505 = vadd.f32 %v190, %v504
  %v506 = vpop.f32.mrb[0].mxu0
  %v507 = vadd.f32 %v194, %v506
  %508 = vdwg.mxu0
  %v509 = vxor.u32 %v434, 2147483648
  %v510 = vmul.f32 %v509, 1.442695
  %v511 = vpow.pop %v510
  %v512 = vadd.f32 %v511, 1.0
  %v513 = vrcp.pop %v512
  %v514 = vmul.f32 1.0, %v513
  %v515 = vxor.u32 %v436, 2147483648
  %v516 = vmul.f32 %v515, 1.442695
  %v517 = vpow.pop %v516
  %v518 = vadd.f32 %v517, 1.0
  %v519 = vrcp.pop %v518
  %v520 = vmul.f32 1.0, %v519
  %v521 = vtanh.pop %v505
  %v522 = vxor.u32 %v507, 2147483648
  %v523 = vmul.f32 %v522, 1.442695
  %v524 = vpow.pop %v523
  %v525 = vadd.f32 %v524, 1.0
  %v526 = vrcp.pop %v525
  %v527 = vmul.f32 1.0, %v526
  %v528 = vmul.f32 %v520, %v362
  %v529 = vmul.f32 %v514, %v521
  %v530 = vadd.f32 %v528, %v529
  %v531 = vtanh.pop %v530
  %v532 = vmul.f32 %v527, %v531
  %s533 = scalar_lea.vmem %s0, 16
  %v534 = vld [vmem:[%s533] sm:$0xff]
  %535 = vmatprep.subr.mxu0 %v30
  %536 = vmatpush1.msra.mxu0 %v29
  %537 = vmatprep.subr.mxu0 %v34
  %538 = vmatpush1.msra.mxu0 %v33
  %539 = vmatprep.subr.mxu0 %v38
  %540 = vmatpush1.msra.mxu0 %v37
  %541 = vmatprep.subr.mxu0 %v42
  %542 = vmatpush1.msra.mxu0 %v41
  %543 = vmatprep.subr.mxu0 %v46
  %544 = vmatpush1.msra.mxu0 %v45
  %545 = vmatprep.subr.mxu0 %v50
  %546 = vmatpush1.msra.mxu0 %v49
  %547 = vmatprep.subr.mxu0 %v54
  %548 = vmatpush1.msra.mxu0 %v53
  %549 = vmatprep.subr.mxu0 %v58
  %550 = vmatpush1.msra.mxu0 %v57
  %551 = vmatprep.subr.mxu0 %v62
  %552 = vmatpush1.msra.mxu0 %v61
  %553 = vmatprep.subr.mxu0 %v66
  %554 = vmatpush1.msra.mxu0 %v65
  %555 = vmatprep.subr.mxu0 %v70
  %556 = vmatpush1.msra.mxu0 %v69
  %557 = vmatprep.subr.mxu0 %v74
  %558 = vmatpush1.msra.mxu0 %v73
  %559 = vmatprep.subr.mxu0 %v78
  %560 = vmatpush1.msra.mxu0 %v77
  %561 = vmatprep.subr.mxu0 %v82
  %562 = vmatpush1.msra.mxu0 %v81
  %563 = vmatprep.subr.mxu0 %v86
  %564 = vmatpush1.msra.mxu0 %v85
  %565 = vmatprep.subr.mxu0 %v90
  %566 = vmatpush1.msra.mxu0 %v89
  %567 = vmatprep.subr.mxu0 %v94
  %568 = vmatpush1.msra.mxu0 %v93
  %569 = vmatprep.subr.mxu0 %v98
  %570 = vmatpush1.msra.mxu0 %v97
  %571 = vmatprep.subr.mxu0 %v102
  %572 = vmatpush1.msra.mxu0 %v101
  %573 = vmatprep.subr.mxu0 %v106
  %574 = vmatpush1.msra.mxu0 %v105
  %575 = vmatprep.subr.mxu0 %v110
  %576 = vmatpush1.msra.mxu0 %v109
  %577 = vmatprep.subr.mxu0 %v114
  %578 = vmatpush1.msra.mxu0 %v113
  %579 = vmatprep.subr.mxu0 %v118
  %580 = vmatpush1.msra.mxu0 %v117
  %581 = vmatprep.subr.mxu0 %v122
  %582 = vmatpush1.msra.mxu0 %v121
  %583 = vmatprep.subr.mxu0 %v126
  %584 = vmatpush1.msra.mxu0 %v125
  %585 = vmatprep.subr.mxu0 %v130
  %586 = vmatpush1.msra.mxu0 %v129
  %587 = vmatprep.subr.mxu0 %v134
  %588 = vmatpush1.msra.mxu0 %v133
  %589 = vmatprep.subr.mxu0 %v138
  %590 = vmatpush1.msra.mxu0 %v137
  %591 = vmatprep.subr.mxu0 %v142
  %592 = vmatpush1.msra.mxu0 %v141
  %593 = vmatprep.subr.mxu0 %v146
  %594 = vmatpush1.msra.mxu0 %v145
  %595 = vmatprep.subr.mxu0 %v150
  %596 = vmatpush1.msra.mxu0 %v149
  %597 = vmatprep.subr.mxu0 %v154
  %598 = vmatpush1.msra.mxu0 %v153
  %599 = vmatprep.mubr.f32.mxu0 %v532
  %600 = vmatmul.mubr.f32.gmra.mrb[0].mxu0 %v534
  %v601 = vpop.f32.mrb[0].mxu0
  %v602 = vadd.f32 %v182, %v601
  %v603 = vpop.f32.mrb[0].mxu0
  %v604 = vadd.f32 %v186, %v603
  %605 = vdwg.mxu0
  %606 = vmatprep.subr.mxu0 %v32
  %607 = vmatpush1.msra.mxu0 %v31
  %608 = vmatprep.subr.mxu0 %v36
  %609 = vmatpush1.msra.mxu0 %v35
  %610 = vmatprep.subr.mxu0 %v40
  %611 = vmatpush1.msra.mxu0 %v39
  %612 = vmatprep.subr.mxu0 %v44
  %613 = vmatpush1.msra.mxu0 %v43
  %614 = vmatprep.subr.mxu0 %v48
  %615 = vmatpush1.msra.mxu0 %v47
  %616 = vmatprep.subr.mxu0 %v52
  %617 = vmatpush1.msra.mxu0 %v51
  %618 = vmatprep.subr.mxu0 %v56
  %619 = vmatpush1.msra.mxu0 %v55
  %620 = vmatprep.subr.mxu0 %v60
  %621 = vmatpush1.msra.mxu0 %v59
  %622 = vmatprep.subr.mxu0 %v64
  %623 = vmatpush1.msra.mxu0 %v63
  %624 = vmatprep.subr.mxu0 %v68
  %625 = vmatpush1.msra.mxu0 %v67
  %626 = vmatprep.subr.mxu0 %v72
  %627 = vmatpush1.msra.mxu0 %v71
  %628 = vmatprep.subr.mxu0 %v76
  %629 = vmatpush1.msra.mxu0 %v75
  %630 = vmatprep.subr.mxu0 %v80
  %631 = vmatpush1.msra.mxu0 %v79
  %632 = vmatprep.subr.mxu0 %v84
  %633 = vmatpush1.msra.mxu0 %v83
  %634 = vmatprep.subr.mxu0 %v88
  %635 = vmatpush1.msra.mxu0 %v87
  %636 = vmatprep.subr.mxu0 %v92
  %637 = vmatpush1.msra.mxu0 %v91
  %638 = vmatprep.subr.mxu0 %v96
  %639 = vmatpush1.msra.mxu0 %v95
  %640 = vmatprep.subr.mxu0 %v100
  %641 = vmatpush1.msra.mxu0 %v99
  %642 = vmatprep.subr.mxu0 %v104
  %643 = vmatpush1.msra.mxu0 %v103
  %644 = vmatprep.subr.mxu0 %v108
  %645 = vmatpush1.msra.mxu0 %v107
  %646 = vmatprep.subr.mxu0 %v112
  %647 = vmatpush1.msra.mxu0 %v111
  %648 = vmatprep.subr.mxu0 %v116
  %649 = vmatpush1.msra.mxu0 %v115
  %650 = vmatprep.subr.mxu0 %v120
  %651 = vmatpush1.msra.mxu0 %v119
  %652 = vmatprep.subr.mxu0 %v124
  %653 = vmatpush1.msra.mxu0 %v123
  %654 = vmatprep.subr.mxu0 %v128
  %655 = vmatpush1.msra.mxu0 %v127
  %656 = vmatprep.subr.mxu0 %v132
  %657 = vmatpush1.msra.mxu0 %v131
  %658 = vmatprep.subr.mxu0 %v136
  %659 = vmatpush1.msra.mxu0 %v135
  %660 = vmatprep.subr.mxu0 %v140
  %661 = vmatpush1.msra.mxu0 %v139
  %662 = vmatprep.subr.mxu0 %v144
  %663 = vmatpush1.msra.mxu0 %v143
  %664 = vmatprep.subr.mxu0 %v148
  %665 = vmatpush1.msra.mxu0 %v147
  %666 = vmatprep.subr.mxu0 %v152
  %667 = vmatpush1.msra.mxu0 %v151
  %668 = vmatprep.subr.mxu0 %v156
  %669 = vmatpush1.msra.mxu0 %v155
  %670 = vmatprep.mubr.f32.mxu0 %v532
  %671 = vmatmul.mubr.f32.gmra.mrb[0].mxu0 %v534
  %v672 = vpop.f32.mrb[0].mxu0
  %v673 = vadd.f32 %v190, %v672
  %v674 = vpop.f32.mrb[0].mxu0
  %v675 = vadd.f32 %v194, %v674
  %676 = vdwg.mxu0
  %v677 = vxor.u32 %v602, 2147483648
  %v678 = vmul.f32 %v677, 1.442695
  %v679 = vpow.pop %v678
  %v680 = vadd.f32 %v679, 1.0
  %v681 = vrcp.pop %v680
  %v682 = vmul.f32 1.0, %v681
  %v683 = vxor.u32 %v604, 2147483648
  %v684 = vmul.f32 %v683, 1.442695
  %v685 = vpow.pop %v684
  %v686 = vadd.f32 %v685, 1.0
  %v687 = vrcp.pop %v686
  %v688 = vmul.f32 1.0, %v687
  %v689 = vtanh.pop %v673
  %v690 = vxor.u32 %v675, 2147483648
  %v691 = vmul.f32 %v690, 1.442695
  %v692 = vpow.pop %v691
  %v693 = vadd.f32 %v692, 1.0
  %v694 = vrcp.pop %v693
  %v695 = vmul.f32 1.0, %v694
  %v696 = vmul.f32 %v688, %v530
  %v697 = vmul.f32 %v682, %v689
  %v698 = vadd.f32 %v696, %v697
  %v699 = vtanh.pop %v698
  %v700 = vmul.f32 %v695, %v699
  %s701 = scalar_lea.vmem %s0, 24
  %v702 = vld [vmem:[%s701] sm:$0xff]
  %703 = vmatprep.subr.mxu0 %v30
  %704 = vmatpush1.msra.mxu0 %v29
  %705 = vmatprep.subr.mxu0 %v34
  %706 = vmatpush1.msra.mxu0 %v33
  %707 = vmatprep.subr.mxu0 %v38
  %708 = vmatpush1.msra.mxu0 %v37
  %709 = vmatprep.subr.mxu0 %v42
  %710 = vmatpush1.msra.mxu0 %v41
  %711 = vmatprep.subr.mxu0 %v46
  %712 = vmatpush1.msra.mxu0 %v45
  %713 = vmatprep.subr.mxu0 %v50
  %714 = vmatpush1.msra.mxu0 %v49
  %715 = vmatprep.subr.mxu0 %v54
  %716 = vmatpush1.msra.mxu0 %v53
  %717 = vmatprep.subr.mxu0 %v58
  %718 = vmatpush1.msra.mxu0 %v57
  %719 = vmatprep.subr.mxu0 %v62
  %720 = vmatpush1.msra.mxu0 %v61
  %721 = vmatprep.subr.mxu0 %v66
  %722 = vmatpush1.msra.mxu0 %v65
  %723 = vmatprep.subr.mxu0 %v70
  %724 = vmatpush1.msra.mxu0 %v69
  %725 = vmatprep.subr.mxu0 %v74
  %726 = vmatpush1.msra.mxu0 %v73
  %727 = vmatprep.subr.mxu0 %v78
  %728 = vmatpush1.msra.mxu0 %v77
  %729 = vmatprep.subr.mxu0 %v82
  %730 = vmatpush1.msra.mxu0 %v81
  %731 = vmatprep.subr.mxu0 %v86
  %732 = vmatpush1.msra.mxu0 %v85
  %733 = vmatprep.subr.mxu0 %v90
  %734 = vmatpush1.msra.mxu0 %v89
  %735 = vmatprep.subr.mxu0 %v94
  %736 = vmatpush1.msra.mxu0 %v93
  %737 = vmatprep.subr.mxu0 %v98
  %738 = vmatpush1.msra.mxu0 %v97
  %739 = vmatprep.subr.mxu0 %v102
  %740 = vmatpush1.msra.mxu0 %v101
  %741 = vmatprep.subr.mxu0 %v106
  %742 = vmatpush1.msra.mxu0 %v105
  %743 = vmatprep.subr.mxu0 %v110
  %744 = vmatpush1.msra.mxu0 %v109
  %745 = vmatprep.subr.mxu0 %v114
  %746 = vmatpush1.msra.mxu0 %v113
  %747 = vmatprep.subr.mxu0 %v118
  %748 = vmatpush1.msra.mxu0 %v117
  %749 = vmatprep.subr.mxu0 %v122
  %750 = vmatpush1.msra.mxu0 %v121
  %751 = vmatprep.subr.mxu0 %v126
  %752 = vmatpush1.msra.mxu0 %v125
  %753 = vmatprep.subr.mxu0 %v130
  %754 = vmatpush1.msra.mxu0 %v129
  %755 = vmatprep.subr.mxu0 %v134
  %756 = vmatpush1.msra.mxu0 %v133
  %757 = vmatprep.subr.mxu0 %v138
  %758 = vmatpush1.msra.mxu0 %v137
  %759 = vmatprep.subr.mxu0 %v142
  %760 = vmatpush1.msra.mxu0 %v141
  %761 = vmatprep.subr.mxu0 %v146
  %762 = vmatpush1.msra.mxu0 %v145
  %763 = vmatprep.subr.mxu0 %v150
  %764 = vmatpush1.msra.mxu0 %v149
  %765 = vmatprep.subr.mxu0 %v154
  %766 = vmatpush1.msra.mxu0 %v153
  %767 = vmatprep.mubr.f32.mxu0 %v700
  %768 = vmatmul.mubr.f32.gmra.mrb[0].mxu0 %v702
  %v769 = vpop.f32.mrb[0].mxu0
  %v770 = vadd.f32 %v182, %v769
  %v771 = vpop.f32.mrb[0].mxu0
  %v772 = vadd.f32 %v186, %v771
  %773 = vdwg.mxu0
  %774 = vmatprep.subr.mxu0 %v32
  %775 = vmatpush1.msra.mxu0 %v31
  %776 = vmatprep.subr.mxu0 %v36
  %777 = vmatpush1.msra.mxu0 %v35
  %778 = vmatprep.subr.mxu0 %v40
  %779 = vmatpush1.msra.mxu0 %v39
  %780 = vmatprep.subr.mxu0 %v44
  %781 = vmatpush1.msra.mxu0 %v43
  %782 = vmatprep.subr.mxu0 %v48
  %783 = vmatpush1.msra.mxu0 %v47
  %784 = vmatprep.subr.mxu0 %v52
  %785 = vmatpush1.msra.mxu0 %v51
  %786 = vmatprep.subr.mxu0 %v56
  %787 = vmatpush1.msra.mxu0 %v55
  %788 = vmatprep.subr.mxu0 %v60
  %789 = vmatpush1.msra.mxu0 %v59
  %790 = vmatprep.subr.mxu0 %v64
  %791 = vmatpush1.msra.mxu0 %v63
  %792 = vmatprep.subr.mxu0 %v68
  %793 = vmatpush1.msra.mxu0 %v67
  %794 = vmatprep.subr.mxu0 %v72
  %795 = vmatpush1.msra.mxu0 %v71
  %796 = vmatprep.subr.mxu0 %v76
  %797 = vmatpush1.msra.mxu0 %v75
  %798 = vmatprep.subr.mxu0 %v80
  %799 = vmatpush1.msra.mxu0 %v79
  %800 = vmatprep.subr.mxu0 %v84
  %801 = vmatpush1.msra.mxu0 %v83
  %802 = vmatprep.subr.mxu0 %v88
  %803 = vmatpush1.msra.mxu0 %v87
  %804 = vmatprep.subr.mxu0 %v92
  %805 = vmatpush1.msra.mxu0 %v91
  %806 = vmatprep.subr.mxu0 %v96
  %807 = vmatpush1.msra.mxu0 %v95
  %808 = vmatprep.subr.mxu0 %v100
  %809 = vmatpush1.msra.mxu0 %v99
  %810 = vmatprep.subr.mxu0 %v104
  %811 = vmatpush1.msra.mxu0 %v103
  %812 = vmatprep.subr.mxu0 %v108
  %813 = vmatpush1.msra.mxu0 %v107
  %814 = vmatprep.subr.mxu0 %v112
  %815 = vmatpush1.msra.mxu0 %v111
  %816 = vmatprep.subr.mxu0 %v116
  %817 = vmatpush1.msra.mxu0 %v115
  %818 = vmatprep.subr.mxu0 %v120
  %819 = vmatpush1.msra.mxu0 %v119
  %820 = vmatprep.subr.mxu0 %v124
  %821 = vmatpush1.msra.mxu0 %v123
  %822 = vmatprep.subr.mxu0 %v128
  %823 = vmatpush1.msra.mxu0 %v127
  %824 = vmatprep.subr.mxu0 %v132
  %825 = vmatpush1.msra.mxu0 %v131
  %826 = vmatprep.subr.mxu0 %v136
  %827 = vmatpush1.msra.mxu0 %v135
  %828 = vmatprep.subr.mxu0 %v140
  %829 = vmatpush1.msra.mxu0 %v139
  %830 = vmatprep.subr.mxu0 %v144
  %831 = vmatpush1.msra.mxu0 %v143
  %832 = vmatprep.subr.mxu0 %v148
  %833 = vmatpush1.msra.mxu0 %v147
  %834 = vmatprep.subr.mxu0 %v152
  %835 = vmatpush1.msra.mxu0 %v151
  %836 = vmatprep.subr.mxu0 %v156
  %837 = vmatpush1.msra.mxu0 %v155
  %838 = vmatprep.mubr.f32.mxu0 %v700
  %839 = vmatmul.mubr.f32.gmra.mrb[0].mxu0 %v702
  %v840 = vpop.f32.mrb[0].mxu0
  %v841 = vadd.f32 %v190, %v840
  %v842 = vpop.f32.mrb[0].mxu0
  %v843 = vadd.f32 %v194, %v842
  %844 = vdwg.mxu0
  %v845 = vxor.u32 %v770, 2147483648
  %v846 = vmul.f32 %v845, 1.442695
  %v847 = vpow.pop %v846
  %v848 = vadd.f32 %v847, 1.0
  %v849 = vrcp.pop %v848
  %v850 = vmul.f32 1.0, %v849
  %v851 = vxor.u32 %v772, 2147483648
  %v852 = vmul.f32 %v851, 1.442695
  %v853 = vpow.pop %v852
  %v854 = vadd.f32 %v853, 1.0
  %v855 = vrcp.pop %v854
  %v856 = vmul.f32 1.0, %v855
  %v857 = vtanh.pop %v841
  %v858 = vxor.u32 %v843, 2147483648
  %v859 = vmul.f32 %v858, 1.442695
  %v860 = vpow.pop %v859
  %v861 = vadd.f32 %v860, 1.0
  %v862 = vrcp.pop %v861
  %v863 = vmul.f32 1.0, %v862
  %v864 = vmul.f32 %v856, %v698
  %v865 = vmul.f32 %v850, %v857
  %v866 = vadd.f32 %v864, %v865
  %v867 = vtanh.pop %v866
  %v868 = vmul.f32 %v863, %v867
  %s869 = scalar_lea.vmem %s0, 32
  %v870 = vld [vmem:[%s869] sm:$0xff]
  %871 = vmatprep.subr.mxu0 %v30
  %872 = vmatpush1.msra.mxu0 %v29
  %873 = vmatprep.subr.mxu0 %v34
  %874 = vmatpush1.msra.mxu0 %v33
  %875 = vmatprep.subr.mxu0 %v38
  %876 = vmatpush1.msra.mxu0 %v37
  %877 = vmatprep.subr.mxu0 %v42
  %878 = vmatpush1.msra.mxu0 %v41
  %879 = vmatprep.subr.mxu0 %v46
  %880 = vmatpush1.msra.mxu0 %v45
  %881 = vmatprep.subr.mxu0 %v50
  %882 = vmatpush1.msra.mxu0 %v49
  %883 = vmatprep.subr.mxu0 %v54
  %884 = vmatpush1.msra.mxu0 %v53
  %885 = vmatprep.subr.mxu0 %v58
  %886 = vmatpush1.msra.mxu0 %v57
  %887 = vmatprep.subr.mxu0 %v62
  %888 = vmatpush1.msra.mxu0 %v61
  %889 = vmatprep.subr.mxu0 %v66
  %890 = vmatpush1.msra.mxu0 %v65
  %891 = vmatprep.subr.mxu0 %v70
  %892 = vmatpush1.msra.mxu0 %v69
  %893 = vmatprep.subr.mxu0 %v74
  %894 = vmatpush1.msra.mxu0 %v73
  %895 = vmatprep.subr.mxu0 %v78
  %896 = vmatpush1.msra.mxu0 %v77
  %897 = vmatprep.subr.mxu0 %v82
  %898 = vmatpush1.msra.mxu0 %v81
  %899 = vmatprep.subr.mxu0 %v86
  %900 = vmatpush1.msra.mxu0 %v85
  %901 = vmatprep.subr.mxu0 %v90
  %902 = vmatpush1.msra.mxu0 %v89
  %903 = vmatprep.subr.mxu0 %v94
  %904 = vmatpush1.msra.mxu0 %v93
  %905 = vmatprep.subr.mxu0 %v98
  %906 = vmatpush1.msra.mxu0 %v97
  %907 = vmatprep.subr.mxu0 %v102
  %908 = vmatpush1.msra.mxu0 %v101
  %909 = vmatprep.subr.mxu0 %v106
  %910 = vmatpush1.msra.mxu0 %v105
  %911 = vmatprep.subr.mxu0 %v110
  %912 = vmatpush1.msra.mxu0 %v109
  %913 = vmatprep.subr.mxu0 %v114
  %914 = vmatpush1.msra.mxu0 %v113
  %915 = vmatprep.subr.mxu0 %v118
  %916 = vmatpush1.msra.mxu0 %v117
  %917 = vmatprep.subr.mxu0 %v122
  %918 = vmatpush1.msra.mxu0 %v121
  %919 = vmatprep.subr.mxu0 %v126
  %920 = vmatpush1.msra.mxu0 %v125
  %921 = vmatprep.subr.mxu0 %v130
  %922 = vmatpush1.msra.mxu0 %v129
  %923 = vmatprep.subr.mxu0 %v134
  %924 = vmatpush1.msra.mxu0 %v133
  %925 = vmatprep.subr.mxu0 %v138
  %926 = vmatpush1.msra.mxu0 %v137
  %927 = vmatprep.subr.mxu0 %v142
  %928 = vmatpush1.msra.mxu0 %v141
  %929 = vmatprep.subr.mxu0 %v146
  %930 = vmatpush1.msra.mxu0 %v145
  %931 = vmatprep.subr.mxu0 %v150
  %932 = vmatpush1.msra.mxu0 %v149
  %933 = vmatprep.subr.mxu0 %v154
  %934 = vmatpush1.msra.mxu0 %v153
  %935 = vmatprep.mubr.f32.mxu0 %v868
  %936 = vmatmul.mubr.f32.gmra.mrb[0].mxu0 %v870
  %v937 = vpop.f32.mrb[0].mxu0
  %v938 = vadd.f32 %v182, %v937
  %v939 = vpop.f32.mrb[0].mxu0
  %v940 = vadd.f32 %v186, %v939
  %941 = vdwg.mxu0
  %942 = vmatprep.subr.mxu0 %v32
  %943 = vmatpush1.msra.mxu0 %v31
  %944 = vmatprep.subr.mxu0 %v36
  %945 = vmatpush1.msra.mxu0 %v35
  %946 = vmatprep.subr.mxu0 %v40
  %947 = vmatpush1.msra.mxu0 %v39
  %948 = vmatprep.subr.mxu0 %v44
  %949 = vmatpush1.msra.mxu0 %v43
  %950 = vmatprep.subr.mxu0 %v48
  %951 = vmatpush1.msra.mxu0 %v47
  %952 = vmatprep.subr.mxu0 %v52
  %953 = vmatpush1.msra.mxu0 %v51
  %954 = vmatprep.subr.mxu0 %v56
  %955 = vmatpush1.msra.mxu0 %v55
  %956 = vmatprep.subr.mxu0 %v60
  %957 = vmatpush1.msra.mxu0 %v59
  %958 = vmatprep.subr.mxu0 %v64
  %959 = vmatpush1.msra.mxu0 %v63
  %960 = vmatprep.subr.mxu0 %v68
  %961 = vmatpush1.msra.mxu0 %v67
  %962 = vmatprep.subr.mxu0 %v72
  %963 = vmatpush1.msra.mxu0 %v71
  %964 = vmatprep.subr.mxu0 %v76
  %965 = vmatpush1.msra.mxu0 %v75
  %966 = vmatprep.subr.mxu0 %v80
  %967 = vmatpush1.msra.mxu0 %v79
  %968 = vmatprep.subr.mxu0 %v84
  %969 = vmatpush1.msra.mxu0 %v83
  %970 = vmatprep.subr.mxu0 %v88
  %971 = vmatpush1.msra.mxu0 %v87
  %972 = vmatprep.subr.mxu0 %v92
  %973 = vmatpush1.msra.mxu0 %v91
  %974 = vmatprep.subr.mxu0 %v96
  %975 = vmatpush1.msra.mxu0 %v95
  %976 = vmatprep.subr.mxu0 %v100
  %977 = vmatpush1.msra.mxu0 %v99
  %978 = vmatprep.subr.mxu0 %v104
  %979 = vmatpush1.msra.mxu0 %v103
  %980 = vmatprep.subr.mxu0 %v108
  %981 = vmatpush1.msra.mxu0 %v107
  %982 = vmatprep.subr.mxu0 %v112
  %983 = vmatpush1.msra.mxu0 %v111
  %984 = vmatprep.subr.mxu0 %v116
  %985 = vmatpush1.msra.mxu0 %v115
  %986 = vmatprep.subr.mxu0 %v120
  %987 = vmatpush1.msra.mxu0 %v119
  %988 = vmatprep.subr.mxu0 %v124
  %989 = vmatpush1.msra.mxu0 %v123
  %990 = vmatprep.subr.mxu0 %v128
  %991 = vmatpush1.msra.mxu0 %v127
  %992 = vmatprep.subr.mxu0 %v132
  %993 = vmatpush1.msra.mxu0 %v131
  %994 = vmatprep.subr.mxu0 %v136
  %995 = vmatpush1.msra.mxu0 %v135
  %996 = vmatprep.subr.mxu0 %v140
  %997 = vmatpush1.msra.mxu0 %v139
  %998 = vmatprep.subr.mxu0 %v144
  %999 = vmatpush1.msra.mxu0 %v143
  %1000 = vmatprep.subr.mxu0 %v148
  %1001 = vmatpush1.msra.mxu0 %v147
  %1002 = vmatprep.subr.mxu0 %v152
  %1003 = vmatpush1.msra.mxu0 %v151
  %1004 = vmatprep.subr.mxu0 %v156
  %1005 = vmatpush1.msra.mxu0 %v155
  %1006 = vmatprep.mubr.f32.mxu0 %v868
  %1007 = vmatmul.mubr.f32.gmra.mrb[0].mxu0 %v870
  %v1008 = vpop.f32.mrb[0].mxu0
  %v1009 = vadd.f32 %v190, %v1008
  %v1010 = vpop.f32.mrb[0].mxu0
  %v1011 = vadd.f32 %v194, %v1010
  %1012 = vdwg.mxu0
  %v1013 = vxor.u32 %v938, 2147483648
  %v1014 = vmul.f32 %v1013, 1.442695
  %v1015 = vpow.pop %v1014
  %v1016 = vadd.f32 %v1015, 1.0
  %v1017 = vrcp.pop %v1016
  %v1018 = vmul.f32 1.0, %v1017
  %v1019 = vxor.u32 %v940, 2147483648
  %v1020 = vmul.f32 %v1019, 1.442695
  %v1021 = vpow.pop %v1020
  %v1022 = vadd.f32 %v1021, 1.0
  %v1023 = vrcp.pop %v1022
  %v1024 = vmul.f32 1.0, %v1023
  %v1025 = vtanh.pop %v1009
  %v1026 = vxor.u32 %v1011, 2147483648
  %v1027 = vmul.f32 %v1026, 1.442695
  %v1028 = vpow.pop %v1027
  %v1029 = vadd.f32 %v1028, 1.0
  %v1030 = vrcp.pop %v1029
  %v1031 = vmul.f32 1.0, %v1030
  %v1032 = vmul.f32 %v1024, %v866
  %v1033 = vmul.f32 %v1018, %v1025
  %v1034 = vadd.f32 %v1032, %v1033
  %v1035 = vtanh.pop %v1034
  %v1036 = vmul.f32 %v1031, %v1035
  %s1037 = scalar_lea.vmem %s0, 40
  %v1038 = vld [vmem:[%s1037] sm:$0xff]
  %1039 = vmatprep.subr.mxu0 %v30
  %1040 = vmatpush1.msra.mxu0 %v29
  %1041 = vmatprep.subr.mxu0 %v34
  %1042 = vmatpush1.msra.mxu0 %v33
  %1043 = vmatprep.subr.mxu0 %v38
  %1044 = vmatpush1.msra.mxu0 %v37
  %1045 = vmatprep.subr.mxu0 %v42
  %1046 = vmatpush1.msra.mxu0 %v41
  %1047 = vmatprep.subr.mxu0 %v46
  %1048 = vmatpush1.msra.mxu0 %v45
  %1049 = vmatprep.subr.mxu0 %v50
  %1050 = vmatpush1.msra.mxu0 %v49
  %1051 = vmatprep.subr.mxu0 %v54
  %1052 = vmatpush1.msra.mxu0 %v53
  %1053 = vmatprep.subr.mxu0 %v58
  %1054 = vmatpush1.msra.mxu0 %v57
  %1055 = vmatprep.subr.mxu0 %v62
  %1056 = vmatpush1.msra.mxu0 %v61
  %1057 = vmatprep.subr.mxu0 %v66
  %1058 = vmatpush1.msra.mxu0 %v65
  %1059 = vmatprep.subr.mxu0 %v70
  %1060 = vmatpush1.msra.mxu0 %v69
  %1061 = vmatprep.subr.mxu0 %v74
  %1062 = vmatpush1.msra.mxu0 %v73
  %1063 = vmatprep.subr.mxu0 %v78
  %1064 = vmatpush1.msra.mxu0 %v77
  %1065 = vmatprep.subr.mxu0 %v82
  %1066 = vmatpush1.msra.mxu0 %v81
  %1067 = vmatprep.subr.mxu0 %v86
  %1068 = vmatpush1.msra.mxu0 %v85
  %1069 = vmatprep.subr.mxu0 %v90
  %1070 = vmatpush1.msra.mxu0 %v89
  %1071 = vmatprep.subr.mxu0 %v94
  %1072 = vmatpush1.msra.mxu0 %v93
  %1073 = vmatprep.subr.mxu0 %v98
  %1074 = vmatpush1.msra.mxu0 %v97
  %1075 = vmatprep.subr.mxu0 %v102
  %1076 = vmatpush1.msra.mxu0 %v101
  %1077 = vmatprep.subr.mxu0 %v106
  %1078 = vmatpush1.msra.mxu0 %v105
  %1079 = vmatprep.subr.mxu0 %v110
  %1080 = vmatpush1.msra.mxu0 %v109
  %1081 = vmatprep.subr.mxu0 %v114
  %1082 = vmatpush1.msra.mxu0 %v113
  %1083 = vmatprep.subr.mxu0 %v118
  %1084 = vmatpush1.msra.mxu0 %v117
  %1085 = vmatprep.subr.mxu0 %v122
  %1086 = vmatpush1.msra.mxu0 %v121
  %1087 = vmatprep.subr.mxu0 %v126
  %1088 = vmatpush1.msra.mxu0 %v125
  %1089 = vmatprep.subr.mxu0 %v130
  %1090 = vmatpush1.msra.mxu0 %v129
  %1091 = vmatprep.subr.mxu0 %v134
  %1092 = vmatpush1.msra.mxu0 %v133
  %1093 = vmatprep.subr.mxu0 %v138
  %1094 = vmatpush1.msra.mxu0 %v137
  %1095 = vmatprep.subr.mxu0 %v142
  %1096 = vmatpush1.msra.mxu0 %v141
  %1097 = vmatprep.subr.mxu0 %v146
  %1098 = vmatpush1.msra.mxu0 %v145
  %1099 = vmatprep.subr.mxu0 %v150
  %1100 = vmatpush1.msra.mxu0 %v149
  %1101 = vmatprep.subr.mxu0 %v154
  %1102 = vmatpush1.msra.mxu0 %v153
  %1103 = vmatprep.mubr.f32.mxu0 %v1036
  %1104 = vmatmul.mubr.f32.gmra.mrb[0].mxu0 %v1038
  %v1105 = vpop.f32.mrb[0].mxu0
  %v1106 = vadd.f32 %v182, %v1105
  %v1107 = vpop.f32.mrb[0].mxu0
  %v1108 = vadd.f32 %v186, %v1107
  %1109 = vdwg.mxu0
  %1110 = vmatprep.subr.mxu0 %v32
  %1111 = vmatpush1.msra.mxu0 %v31
  %1112 = vmatprep.subr.mxu0 %v36
  %1113 = vmatpush1.msra.mxu0 %v35
  %1114 = vmatprep.subr.mxu0 %v40
  %1115 = vmatpush1.msra.mxu0 %v39
  %1116 = vmatprep.subr.mxu0 %v44
  %1117 = vmatpush1.msra.mxu0 %v43
  %1118 = vmatprep.subr.mxu0 %v48
  %1119 = vmatpush1.msra.mxu0 %v47
  %1120 = vmatprep.subr.mxu0 %v52
  %1121 = vmatpush1.msra.mxu0 %v51
  %1122 = vmatprep.subr.mxu0 %v56
  %1123 = vmatpush1.msra.mxu0 %v55
  %1124 = vmatprep.subr.mxu0 %v60
  %1125 = vmatpush1.msra.mxu0 %v59
  %1126 = vmatprep.subr.mxu0 %v64
  %1127 = vmatpush1.msra.mxu0 %v63
  %1128 = vmatprep.subr.mxu0 %v68
  %1129 = vmatpush1.msra.mxu0 %v67
  %1130 = vmatprep.subr.mxu0 %v72
  %1131 = vmatpush1.msra.mxu0 %v71
  %1132 = vmatprep.subr.mxu0 %v76
  %1133 = vmatpush1.msra.mxu0 %v75
  %1134 = vmatprep.subr.mxu0 %v80
  %1135 = vmatpush1.msra.mxu0 %v79
  %1136 = vmatprep.subr.mxu0 %v84
  %1137 = vmatpush1.msra.mxu0 %v83
  %1138 = vmatprep.subr.mxu0 %v88
  %1139 = vmatpush1.msra.mxu0 %v87
  %1140 = vmatprep.subr.mxu0 %v92
  %1141 = vmatpush1.msra.mxu0 %v91
  %1142 = vmatprep.subr.mxu0 %v96
  %1143 = vmatpush1.msra.mxu0 %v95
  %1144 = vmatprep.subr.mxu0 %v100
  %1145 = vmatpush1.msra.mxu0 %v99
  %1146 = vmatprep.subr.mxu0 %v104
  %1147 = vmatpush1.msra.mxu0 %v103
  %1148 = vmatprep.subr.mxu0 %v108
  %1149 = vmatpush1.msra.mxu0 %v107
  %1150 = vmatprep.subr.mxu0 %v112
  %1151 = vmatpush1.msra.mxu0 %v111
  %1152 = vmatprep.subr.mxu0 %v116
  %1153 = vmatpush1.msra.mxu0 %v115
  %1154 = vmatprep.subr.mxu0 %v120
  %1155 = vmatpush1.msra.mxu0 %v119
  %1156 = vmatprep.subr.mxu0 %v124
  %1157 = vmatpush1.msra.mxu0 %v123
  %1158 = vmatprep.subr.mxu0 %v128
  %1159 = vmatpush1.msra.mxu0 %v127
  %1160 = vmatprep.subr.mxu0 %v132
  %1161 = vmatpush1.msra.mxu0 %v131
  %1162 = vmatprep.subr.mxu0 %v136
  %1163 = vmatpush1.msra.mxu0 %v135
  %1164 = vmatprep.subr.mxu0 %v140
  %1165 = vmatpush1.msra.mxu0 %v139
  %1166 = vmatprep.subr.mxu0 %v144
  %1167 = vmatpush1.msra.mxu0 %v143
  %1168 = vmatprep.subr.mxu0 %v148
  %1169 = vmatpush1.msra.mxu0 %v147
  %1170 = vmatprep.subr.mxu0 %v152
  %1171 = vmatpush1.msra.mxu0 %v151
  %1172 = vmatprep.subr.mxu0 %v156
  %1173 = vmatpush1.msra.mxu0 %v155
  %1174 = vmatprep.mubr.f32.mxu0 %v1036
  %1175 = vmatmul.mubr.f32.gmra.mrb[0].mxu0 %v1038
  %v1176 = vpop.f32.mrb[0].mxu0
  %v1177 = vadd.f32 %v190, %v1176
  %v1178 = vpop.f32.mrb[0].mxu0
  %v1179 = vadd.f32 %v194, %v1178
  %1180 = vdwg.mxu0
  %v1181 = vxor.u32 %v1106, 2147483648
  %v1182 = vmul.f32 %v1181, 1.442695
  %v1183 = vpow.pop %v1182
  %v1184 = vadd.f32 %v1183, 1.0
  %v1185 = vrcp.pop %v1184
  %v1186 = vmul.f32 1.0, %v1185
  %v1187 = vxor.u32 %v1108, 2147483648
  %v1188 = vmul.f32 %v1187, 1.442695
  %v1189 = vpow.pop %v1188
  %v1190 = vadd.f32 %v1189, 1.0
  %v1191 = vrcp.pop %v1190
  %v1192 = vmul.f32 1.0, %v1191
  %v1193 = vtanh.pop %v1177
  %v1194 = vxor.u32 %v1179, 2147483648
  %v1195 = vmul.f32 %v1194, 1.442695
  %v1196 = vpow.pop %v1195
  %v1197 = vadd.f32 %v1196, 1.0
  %v1198 = vrcp.pop %v1197
  %v1199 = vmul.f32 1.0, %v1198
  %v1200 = vmul.f32 %v1192, %v1034
  %v1201 = vmul.f32 %v1186, %v1193
  %v1202 = vadd.f32 %v1200, %v1201
  %v1203 = vtanh.pop %v1202
  %v1204 = vmul.f32 %v1199, %v1203
  %s1205 = scalar_lea.vmem %s0, 48
  %v1206 = vld [vmem:[%s1205] sm:$0xff]
  %1207 = vmatprep.subr.mxu0 %v30
  %1208 = vmatpush1.msra.mxu0 %v29
  %1209 = vmatprep.subr.mxu0 %v34
  %1210 = vmatpush1.msra.mxu0 %v33
  %1211 = vmatprep.subr.mxu0 %v38
  %1212 = vmatpush1.msra.mxu0 %v37
  %1213 = vmatprep.subr.mxu0 %v42
  %1214 = vmatpush1.msra.mxu0 %v41
  %1215 = vmatprep.subr.mxu0 %v46
  %1216 = vmatpush1.msra.mxu0 %v45
  %1217 = vmatprep.subr.mxu0 %v50
  %1218 = vmatpush1.msra.mxu0 %v49
  %1219 = vmatprep.subr.mxu0 %v54
  %1220 = vmatpush1.msra.mxu0 %v53
  %1221 = vmatprep.subr.mxu0 %v58
  %1222 = vmatpush1.msra.mxu0 %v57
  %1223 = vmatprep.subr.mxu0 %v62
  %1224 = vmatpush1.msra.mxu0 %v61
  %1225 = vmatprep.subr.mxu0 %v66
  %1226 = vmatpush1.msra.mxu0 %v65
  %1227 = vmatprep.subr.mxu0 %v70
  %1228 = vmatpush1.msra.mxu0 %v69
  %1229 = vmatprep.subr.mxu0 %v74
  %1230 = vmatpush1.msra.mxu0 %v73
  %1231 = vmatprep.subr.mxu0 %v78
  %1232 = vmatpush1.msra.mxu0 %v77
  %1233 = vmatprep.subr.mxu0 %v82
  %1234 = vmatpush1.msra.mxu0 %v81
  %1235 = vmatprep.subr.mxu0 %v86
  %1236 = vmatpush1.msra.mxu0 %v85
  %1237 = vmatprep.subr.mxu0 %v90
  %1238 = vmatpush1.msra.mxu0 %v89
  %1239 = vmatprep.subr.mxu0 %v94
  %1240 = vmatpush1.msra.mxu0 %v93
  %1241 = vmatprep.subr.mxu0 %v98
  %1242 = vmatpush1.msra.mxu0 %v97
  %1243 = vmatprep.subr.mxu0 %v102
  %1244 = vmatpush1.msra.mxu0 %v101
  %1245 = vmatprep.subr.mxu0 %v106
  %1246 = vmatpush1.msra.mxu0 %v105
  %1247 = vmatprep.subr.mxu0 %v110
  %1248 = vmatpush1.msra.mxu0 %v109
  %1249 = vmatprep.subr.mxu0 %v114
  %1250 = vmatpush1.msra.mxu0 %v113
  %1251 = vmatprep.subr.mxu0 %v118
  %1252 = vmatpush1.msra.mxu0 %v117
  %1253 = vmatprep.subr.mxu0 %v122
  %1254 = vmatpush1.msra.mxu0 %v121
  %1255 = vmatprep.subr.mxu0 %v126
  %1256 = vmatpush1.msra.mxu0 %v125
  %1257 = vmatprep.subr.mxu0 %v130
  %1258 = vmatpush1.msra.mxu0 %v129
  %1259 = vmatprep.subr.mxu0 %v134
  %1260 = vmatpush1.msra.mxu0 %v133
  %1261 = vmatprep.subr.mxu0 %v138
  %1262 = vmatpush1.msra.mxu0 %v137
  %1263 = vmatprep.subr.mxu0 %v142
  %1264 = vmatpush1.msra.mxu0 %v141
  %1265 = vmatprep.subr.mxu0 %v146
  %1266 = vmatpush1.msra.mxu0 %v145
  %1267 = vmatprep.subr.mxu0 %v150
  %1268 = vmatpush1.msra.mxu0 %v149
  %1269 = vmatprep.subr.mxu0 %v154
  %1270 = vmatpush1.msra.mxu0 %v153
  %1271 = vmatprep.mubr.f32.mxu0 %v1204
  %1272 = vmatmul.mubr.f32.gmra.mrb[0].mxu0 %v1206
  %v1273 = vpop.f32.mrb[0].mxu0
  %v1274 = vadd.f32 %v182, %v1273
  %v1275 = vpop.f32.mrb[0].mxu0
  %v1276 = vadd.f32 %v186, %v1275
  %1277 = vdwg.mxu0
  %1278 = vmatprep.subr.mxu0 %v32
  %1279 = vmatpush1.msra.mxu0 %v31
  %1280 = vmatprep.subr.mxu0 %v36
  %1281 = vmatpush1.msra.mxu0 %v35
  %1282 = vmatprep.subr.mxu0 %v40
  %1283 = vmatpush1.msra.mxu0 %v39
  %1284 = vmatprep.subr.mxu0 %v44
  %1285 = vmatpush1.msra.mxu0 %v43
  %1286 = vmatprep.subr.mxu0 %v48
  %1287 = vmatpush1.msra.mxu0 %v47
  %1288 = vmatprep.subr.mxu0 %v52
  %1289 = vmatpush1.msra.mxu0 %v51
  %1290 = vmatprep.subr.mxu0 %v56
  %1291 = vmatpush1.msra.mxu0 %v55
  %1292 = vmatprep.subr.mxu0 %v60
  %1293 = vmatpush1.msra.mxu0 %v59
  %1294 = vmatprep.subr.mxu0 %v64
  %1295 = vmatpush1.msra.mxu0 %v63
  %1296 = vmatprep.subr.mxu0 %v68
  %1297 = vmatpush1.msra.mxu0 %v67
  %1298 = vmatprep.subr.mxu0 %v72
  %1299 = vmatpush1.msra.mxu0 %v71
  %1300 = vmatprep.subr.mxu0 %v76
  %1301 = vmatpush1.msra.mxu0 %v75
  %1302 = vmatprep.subr.mxu0 %v80
  %1303 = vmatpush1.msra.mxu0 %v79
  %1304 = vmatprep.subr.mxu0 %v84
  %1305 = vmatpush1.msra.mxu0 %v83
  %1306 = vmatprep.subr.mxu0 %v88
  %1307 = vmatpush1.msra.mxu0 %v87
  %1308 = vmatprep.subr.mxu0 %v92
  %1309 = vmatpush1.msra.mxu0 %v91
  %1310 = vmatprep.subr.mxu0 %v96
  %1311 = vmatpush1.msra.mxu0 %v95
  %1312 = vmatprep.subr.mxu0 %v100
  %1313 = vmatpush1.msra.mxu0 %v99
  %1314 = vmatprep.subr.mxu0 %v104
  %1315 = vmatpush1.msra.mxu0 %v103
  %1316 = vmatprep.subr.mxu0 %v108
  %1317 = vmatpush1.msra.mxu0 %v107
  %1318 = vmatprep.subr.mxu0 %v112
  %1319 = vmatpush1.msra.mxu0 %v111
  %1320 = vmatprep.subr.mxu0 %v116
  %1321 = vmatpush1.msra.mxu0 %v115
  %1322 = vmatprep.subr.mxu0 %v120
  %1323 = vmatpush1.msra.mxu0 %v119
  %1324 = vmatprep.subr.mxu0 %v124
  %1325 = vmatpush1.msra.mxu0 %v123
  %1326 = vmatprep.subr.mxu0 %v128
  %1327 = vmatpush1.msra.mxu0 %v127
  %1328 = vmatprep.subr.mxu0 %v132
  %1329 = vmatpush1.msra.mxu0 %v131
  %1330 = vmatprep.subr.mxu0 %v136
  %1331 = vmatpush1.msra.mxu0 %v135
  %1332 = vmatprep.subr.mxu0 %v140
  %1333 = vmatpush1.msra.mxu0 %v139
  %1334 = vmatprep.subr.mxu0 %v144
  %1335 = vmatpush1.msra.mxu0 %v143
  %1336 = vmatprep.subr.mxu0 %v148
  %1337 = vmatpush1.msra.mxu0 %v147
  %1338 = vmatprep.subr.mxu0 %v152
  %1339 = vmatpush1.msra.mxu0 %v151
  %1340 = vmatprep.subr.mxu0 %v156
  %1341 = vmatpush1.msra.mxu0 %v155
  %1342 = vmatprep.mubr.f32.mxu0 %v1204
  %1343 = vmatmul.mubr.f32.gmra.mrb[0].mxu0 %v1206
  %v1344 = vpop.f32.mrb[0].mxu0
  %v1345 = vadd.f32 %v190, %v1344
  %v1346 = vpop.f32.mrb[0].mxu0
  %v1347 = vadd.f32 %v194, %v1346
  %1348 = vdwg.mxu0
  %v1349 = vxor.u32 %v1274, 2147483648
  %v1350 = vmul.f32 %v1349, 1.442695
  %v1351 = vpow.pop %v1350
  %v1352 = vadd.f32 %v1351, 1.0
  %v1353 = vrcp.pop %v1352
  %v1354 = vmul.f32 1.0, %v1353
  %v1355 = vxor.u32 %v1276, 2147483648
  %v1356 = vmul.f32 %v1355, 1.442695
  %v1357 = vpow.pop %v1356
  %v1358 = vadd.f32 %v1357, 1.0
  %v1359 = vrcp.pop %v1358
  %v1360 = vmul.f32 1.0, %v1359
  %v1361 = vtanh.pop %v1345
  %v1362 = vxor.u32 %v1347, 2147483648
  %v1363 = vmul.f32 %v1362, 1.442695
  %v1364 = vpow.pop %v1363
  %v1365 = vadd.f32 %v1364, 1.0
  %v1366 = vrcp.pop %v1365
  %v1367 = vmul.f32 1.0, %v1366
  %v1368 = vmul.f32 %v1360, %v1202
  %v1369 = vmul.f32 %v1354, %v1361
  %v1370 = vadd.f32 %v1368, %v1369
  %v1371 = vtanh.pop %v1370
  %v1372 = vmul.f32 %v1367, %v1371
  %s1373 = scalar_lea.vmem %s0, 56
  %v1374 = vld [vmem:[%s1373] sm:$0xff]
  %1375 = vmatprep.subr.mxu0 %v30
  %1376 = vmatpush1.msra.mxu0 %v29
  %1377 = vmatprep.subr.mxu0 %v34
  %1378 = vmatpush1.msra.mxu0 %v33
  %1379 = vmatprep.subr.mxu0 %v38
  %1380 = vmatpush1.msra.mxu0 %v37
  %1381 = vmatprep.subr.mxu0 %v42
  %1382 = vmatpush1.msra.mxu0 %v41
  %1383 = vmatprep.subr.mxu0 %v46
  %1384 = vmatpush1.msra.mxu0 %v45
  %1385 = vmatprep.subr.mxu0 %v50
  %1386 = vmatpush1.msra.mxu0 %v49
  %1387 = vmatprep.subr.mxu0 %v54
  %1388 = vmatpush1.msra.mxu0 %v53
  %1389 = vmatprep.subr.mxu0 %v58
  %1390 = vmatpush1.msra.mxu0 %v57
  %1391 = vmatprep.subr.mxu0 %v62
  %1392 = vmatpush1.msra.mxu0 %v61
  %1393 = vmatprep.subr.mxu0 %v66
  %1394 = vmatpush1.msra.mxu0 %v65
  %1395 = vmatprep.subr.mxu0 %v70
  %1396 = vmatpush1.msra.mxu0 %v69
  %1397 = vmatprep.subr.mxu0 %v74
  %1398 = vmatpush1.msra.mxu0 %v73
  %1399 = vmatprep.subr.mxu0 %v78
  %1400 = vmatpush1.msra.mxu0 %v77
  %1401 = vmatprep.subr.mxu0 %v82
  %1402 = vmatpush1.msra.mxu0 %v81
  %1403 = vmatprep.subr.mxu0 %v86
  %1404 = vmatpush1.msra.mxu0 %v85
  %1405 = vmatprep.subr.mxu0 %v90
  %1406 = vmatpush1.msra.mxu0 %v89
  %1407 = vmatprep.subr.mxu0 %v94
  %1408 = vmatpush1.msra.mxu0 %v93
  %1409 = vmatprep.subr.mxu0 %v98
  %1410 = vmatpush1.msra.mxu0 %v97
  %1411 = vmatprep.subr.mxu0 %v102
  %1412 = vmatpush1.msra.mxu0 %v101
  %1413 = vmatprep.subr.mxu0 %v106
  %1414 = vmatpush1.msra.mxu0 %v105
  %1415 = vmatprep.subr.mxu0 %v110
  %1416 = vmatpush1.msra.mxu0 %v109
  %1417 = vmatprep.subr.mxu0 %v114
  %1418 = vmatpush1.msra.mxu0 %v113
  %1419 = vmatprep.subr.mxu0 %v118
  %1420 = vmatpush1.msra.mxu0 %v117
  %1421 = vmatprep.subr.mxu0 %v122
  %1422 = vmatpush1.msra.mxu0 %v121
  %1423 = vmatprep.subr.mxu0 %v126
  %1424 = vmatpush1.msra.mxu0 %v125
  %1425 = vmatprep.subr.mxu0 %v130
  %1426 = vmatpush1.msra.mxu0 %v129
  %1427 = vmatprep.subr.mxu0 %v134
  %1428 = vmatpush1.msra.mxu0 %v133
  %1429 = vmatprep.subr.mxu0 %v138
  %1430 = vmatpush1.msra.mxu0 %v137
  %1431 = vmatprep.subr.mxu0 %v142
  %1432 = vmatpush1.msra.mxu0 %v141
  %1433 = vmatprep.subr.mxu0 %v146
  %1434 = vmatpush1.msra.mxu0 %v145
  %1435 = vmatprep.subr.mxu0 %v150
  %1436 = vmatpush1.msra.mxu0 %v149
  %1437 = vmatprep.subr.mxu0 %v154
  %1438 = vmatpush1.msra.mxu0 %v153
  %1439 = vmatprep.mubr.f32.mxu0 %v1372
  %1440 = vmatmul.mubr.f32.gmra.mrb[0].mxu0 %v1374
  %v1441 = vpop.f32.mrb[0].mxu0
  %v1442 = vadd.f32 %v182, %v1441
  %v1443 = vpop.f32.mrb[0].mxu0
  %v1444 = vadd.f32 %v186, %v1443
  %1445 = vdwg.mxu0
  %1446 = vmatprep.subr.mxu0 %v32
  %1447 = vmatpush1.msra.mxu0 %v31
  %1448 = vmatprep.subr.mxu0 %v36
  %1449 = vmatpush1.msra.mxu0 %v35
  %1450 = vmatprep.subr.mxu0 %v40
  %1451 = vmatpush1.msra.mxu0 %v39
  %1452 = vmatprep.subr.mxu0 %v44
  %1453 = vmatpush1.msra.mxu0 %v43
  %1454 = vmatprep.subr.mxu0 %v48
  %1455 = vmatpush1.msra.mxu0 %v47
  %1456 = vmatprep.subr.mxu0 %v52
  %1457 = vmatpush1.msra.mxu0 %v51
  %1458 = vmatprep.subr.mxu0 %v56
  %1459 = vmatpush1.msra.mxu0 %v55
  %1460 = vmatprep.subr.mxu0 %v60
  %1461 = vmatpush1.msra.mxu0 %v59
  %1462 = vmatprep.subr.mxu0 %v64
  %1463 = vmatpush1.msra.mxu0 %v63
  %1464 = vmatprep.subr.mxu0 %v68
  %1465 = vmatpush1.msra.mxu0 %v67
  %1466 = vmatprep.subr.mxu0 %v72
  %1467 = vmatpush1.msra.mxu0 %v71
  %1468 = vmatprep.subr.mxu0 %v76
  %1469 = vmatpush1.msra.mxu0 %v75
  %1470 = vmatprep.subr.mxu0 %v80
  %1471 = vmatpush1.msra.mxu0 %v79
  %1472 = vmatprep.subr.mxu0 %v84
  %1473 = vmatpush1.msra.mxu0 %v83
  %1474 = vmatprep.subr.mxu0 %v88
  %1475 = vmatpush1.msra.mxu0 %v87
  %1476 = vmatprep.subr.mxu0 %v92
  %1477 = vmatpush1.msra.mxu0 %v91
  %1478 = vmatprep.subr.mxu0 %v96
  %1479 = vmatpush1.msra.mxu0 %v95
  %1480 = vmatprep.subr.mxu0 %v100
  %1481 = vmatpush1.msra.mxu0 %v99
  %1482 = vmatprep.subr.mxu0 %v104
  %1483 = vmatpush1.msra.mxu0 %v103
  %1484 = vmatprep.subr.mxu0 %v108
  %1485 = vmatpush1.msra.mxu0 %v107
  %1486 = vmatprep.subr.mxu0 %v112
  %1487 = vmatpush1.msra.mxu0 %v111
  %1488 = vmatprep.subr.mxu0 %v116
  %1489 = vmatpush1.msra.mxu0 %v115
  %1490 = vmatprep.subr.mxu0 %v120
  %1491 = vmatpush1.msra.mxu0 %v119
  %1492 = vmatprep.subr.mxu0 %v124
  %1493 = vmatpush1.msra.mxu0 %v123
  %1494 = vmatprep.subr.mxu0 %v128
  %1495 = vmatpush1.msra.mxu0 %v127
  %1496 = vmatprep.subr.mxu0 %v132
  %1497 = vmatpush1.msra.mxu0 %v131
  %1498 = vmatprep.subr.mxu0 %v136
  %1499 = vmatpush1.msra.mxu0 %v135
  %1500 = vmatprep.subr.mxu0 %v140
  %1501 = vmatpush1.msra.mxu0 %v139
  %1502 = vmatprep.subr.mxu0 %v144
  %1503 = vmatpush1.msra.mxu0 %v143
  %1504 = vmatprep.subr.mxu0 %v148
  %1505 = vmatpush1.msra.mxu0 %v147
  %1506 = vmatprep.subr.mxu0 %v152
  %1507 = vmatpush1.msra.mxu0 %v151
  %1508 = vmatprep.subr.mxu0 %v156
  %1509 = vmatpush1.msra.mxu0 %v155
  %1510 = vmatprep.mubr.f32.mxu0 %v1372
  %1511 = vmatmul.mubr.f32.gmra.mrb[0].mxu0 %v1374
  %v1512 = vpop.f32.mrb[0].mxu0
  %v1513 = vadd.f32 %v190, %v1512
  %v1514 = vpop.f32.mrb[0].mxu0
  %v1515 = vadd.f32 %v194, %v1514
  %1516 = vdwg.mxu0
  %v1517 = vxor.u32 %v1442, 2147483648
  %v1518 = vmul.f32 %v1517, 1.442695
  %v1519 = vpow.pop %v1518
  %v1520 = vadd.f32 %v1519, 1.0
  %v1521 = vrcp.pop %v1520
  %v1522 = vmul.f32 1.0, %v1521
  %v1523 = vxor.u32 %v1444, 2147483648
  %v1524 = vmul.f32 %v1523, 1.442695
  %v1525 = vpow.pop %v1524
  %v1526 = vadd.f32 %v1525, 1.0
  %v1527 = vrcp.pop %v1526
  %v1528 = vmul.f32 1.0, %v1527
  %v1529 = vtanh.pop %v1513
  %v1530 = vxor.u32 %v1515, 2147483648
  %v1531 = vmul.f32 %v1530, 1.442695
  %v1532 = vpow.pop %v1531
  %v1533 = vadd.f32 %v1532, 1.0
  %v1534 = vrcp.pop %v1533
  %v1535 = vmul.f32 1.0, %v1534
  %v1536 = vmul.f32 %v1528, %v1370
  %v1537 = vmul.f32 %v1522, %v1529
  %v1538 = vadd.f32 %v1536, %v1537
  %v1539 = vtanh.pop %v1538
  %v1540 = vmul.f32 %v1535, %v1539
  %1541 = vst [vmem:[%s8] sm:$0xff] %v1540
  %1542 = vst [vmem:[%s9] sm:$0xff] %v1538
  %v1544 = vlaneseq
  %v1545 = vshrl.u32 %v1544, 7
  %v1546 = vsub.s32 0, %v1545
  %v1547 = vrot.slane %v174, %v1546
  %1549 = vmatprep.subr.mxu0 0.0
  %1550 = vmatpush1.msra.mxu0 %v158
  %1551 = vmatprep.subr.mxu0 0.0
  %1552 = vmatpush1.msra.mxu0 %v159
  %1553 = vmatprep.subr.mxu0 0.0
  %1554 = vmatpush1.msra.mxu0 %v160
  %1555 = vmatprep.subr.mxu0 0.0
  %1556 = vmatpush1.msra.mxu0 %v161
  %1557 = vmatprep.subr.mxu0 0.0
  %1558 = vmatpush1.msra.mxu0 %v162
  %1559 = vmatprep.subr.mxu0 0.0
  %1560 = vmatpush1.msra.mxu0 %v163
  %1561 = vmatprep.subr.mxu0 0.0
  %1562 = vmatpush1.msra.mxu0 %v164
  %1563 = vmatprep.subr.mxu0 0.0
  %1564 = vmatpush1.msra.mxu0 %v165
  %1565 = vmatprep.subr.mxu0 0.0
  %1566 = vmatpush1.msra.mxu0 %v166
  %1567 = vmatprep.subr.mxu0 0.0
  %1568 = vmatpush1.msra.mxu0 %v167
  %1569 = vmatprep.subr.mxu0 0.0
  %1570 = vmatpush1.msra.mxu0 %v168
  %1571 = vmatprep.subr.mxu0 0.0
  %1572 = vmatpush1.msra.mxu0 %v169
  %1573 = vmatprep.subr.mxu0 0.0
  %1574 = vmatpush1.msra.mxu0 %v170
  %1575 = vmatprep.subr.mxu0 0.0
  %1576 = vmatpush1.msra.mxu0 %v171
  %1577 = vmatprep.subr.mxu0 0.0
  %1578 = vmatpush1.msra.mxu0 %v172
  %1579 = vmatprep.subr.mxu0 0.0
  %1580 = vmatpush1.msra.mxu0 %v173
  %1581 = vmatprep.subr.mxu0 0.0
  %1582 = vmatpush1.msra.mxu0 0.0
  %1583 = vmatprep.subr.mxu0 0.0
  %1584 = vmatpush1.msra.mxu0 0.0
  %1585 = vmatprep.subr.mxu0 0.0
  %1586 = vmatpush1.msra.mxu0 0.0
  %1587 = vmatprep.subr.mxu0 0.0
  %1588 = vmatpush1.msra.mxu0 0.0
  %1589 = vmatprep.subr.mxu0 0.0
  %1590 = vmatpush1.msra.mxu0 0.0
  %1591 = vmatprep.subr.mxu0 0.0
  %1592 = vmatpush1.msra.mxu0 0.0
  %1593 = vmatprep.subr.mxu0 0.0
  %1594 = vmatpush1.msra.mxu0 0.0
  %1595 = vmatprep.subr.mxu0 0.0
  %1596 = vmatpush1.msra.mxu0 0.0
  %1597 = vmatprep.subr.mxu0 0.0
  %1598 = vmatpush1.msra.mxu0 0.0
  %1599 = vmatprep.subr.mxu0 0.0
  %1600 = vmatpush1.msra.mxu0 0.0
  %1601 = vmatprep.subr.mxu0 0.0
  %1602 = vmatpush1.msra.mxu0 0.0
  %1603 = vmatprep.subr.mxu0 0.0
  %1604 = vmatpush1.msra.mxu0 0.0
  %1605 = vmatprep.subr.mxu0 0.0
  %1606 = vmatpush1.msra.mxu0 0.0
  %1607 = vmatprep.subr.mxu0 0.0
  %1608 = vmatpush1.msra.mxu0 0.0
  %1609 = vmatprep.subr.mxu0 0.0
  %1610 = vmatpush1.msra.mxu0 0.0
  %1611 = vmatprep.subr.mxu0 0.0
  %1612 = vmatpush1.msra.mxu0 0.0
  %1613 = vmatprep.mubr.f32.mxu0 0.0
  %1614 = vmatmul.mubr.f32.gmra.mrb[0].mxu0 %v1540
  %v1615 = vpop.f32.mrb[0].mxu0
  %v1616 = vadd.f32 %v1547, %v1615
  %v1617 = vpop.f32.mrb[0].mxu0
  %1618 = vdwg.mxu0
  %1619 = vst [vmem:[%s7] sm:$0xff] %v1616
  // Predicated region
  $region30: #{lstm_forward.1} parent=0 // pred_check
    _
  $region31: #{lstm_forward.1} parent=0 // pred_check_branch
    %1621 = sbr.rel (0) target = $region33
  $region32: #{lstm_forward.1} parent=0 // pred_region
    _
  $region33: #{lstm_forward.1} parent=0 // pred_fallthru
    _
  // Predicated region
  $region34: #{lstm_forward.1} parent=0 // pred_check
    _
  $region35: #{lstm_forward.1} parent=0 // pred_check_branch
    %1623 = sbr.rel (0) target = $region37
  $region36: #{lstm_forward.1} parent=0 // pred_region
    _
  $region37: #{lstm_forward.1} parent=0 // pred_fallthru
    _
  // Predicated region
  $region38: #{lstm_forward.1} parent=0 // pred_check
    _
  $region39: #{lstm_forward.1} parent=0 // pred_check_branch
    %1625 = sbr.rel (0) target = $region41
  $region40: #{lstm_forward.1} parent=0 // pred_region
    _
  $region41: #{lstm_forward.1} parent=0 // pred_fallthru
    _
  // Predicated region
  $region42: #{lstm_forward.1} parent=0 // pred_check
    _
  $region43: #{lstm_forward.1} parent=0 // pred_check_branch
    %1627 = sbr.rel (0) target = $region45
  $region44: #{lstm_forward.1} parent=0 // pred_region
    _
  $region45: #{lstm_forward.1} parent=0 // pred_fallthru
    _
  // Predicated region
  $region46: #{lstm_forward.1} parent=0 // pred_check
    _
  $region47: #{lstm_forward.1} parent=0 // pred_check_branch
    %1629 = sbr.rel (0) target = $region49
  $region48: #{lstm_forward.1} parent=0 // pred_region
    _
  $region49: #{lstm_forward.1} parent=0 // pred_fallthru
    _
  // Predicated region
  $region50: #{lstm_forward.1} parent=0 // pred_check
    _
  $region51: #{lstm_forward.1} parent=0 // pred_check_branch
    %1631 = sbr.rel (0) target = $region53
  $region52: #{lstm_forward.1} parent=0 // pred_region
    _
  $region53: #{lstm_forward.1} parent=0 // pred_fallthru
    _

</llo_original>
